<compile_context>
chip_gen: v7x
topology: tpu7x:2x2x1
jax: 0.10.0
libtpu: 0.0.40
codegen_flags: <defaults>
</compile_context>

<pallas_src>
import jax
import jax.numpy as jnp
from jax.experimental import pallas as pl
from jax.experimental.pallas import tpu as pltpu


LAYER_DIMS = (256, 512, 1024, 512, 256, 128, 1)


def make_mlp_kernel(in_features):
    """Fused-MLP kernel for the fixed 7-layer architecture above."""
    d_in = in_features

    def mlp_kernel(x_ref, b_hbm, w256_hbm, w512_hbm, w1024_hbm, w128_hbm,
                   out_ref,
                   b_v, w256_v, w512_v, w1024_v, w128_v, sem):
        # Issue every chunk DMA immediately; order so layer-1 data lands
        # first and the rest of the stream hides under the matmul chain.
        cp_w256 = pltpu.make_async_copy(w256_hbm, w256_v, sem.at[0])
        cp_b = pltpu.make_async_copy(b_hbm, b_v, sem.at[1])
        cp_w512 = pltpu.make_async_copy(w512_hbm, w512_v, sem.at[2])
        cp_w1024 = pltpu.make_async_copy(w1024_hbm, w1024_v, sem.at[3])
        cp_w128 = pltpu.make_async_copy(w128_hbm, w128_v, sem.at[4])
        for cp in (cp_w256, cp_b, cp_w512, cp_w1024, cp_w128):
            cp.start()

        h = x_ref[...].astype(jnp.bfloat16)                       # (B, d_in)

        # Layer 1: d_in -> 256   (w1 lives at rows [512, 512+d_in) of w256)
        cp_w256.wait()
        y = jnp.dot(h, w256_v[512:512 + d_in, :],
                    preferred_element_type=jnp.float32)
        cp_b.wait()                                # bias wait off critical path
        h = jnp.maximum(y + b_v[0:1, 0:256], 0.0).astype(jnp.bfloat16)

        # Layer 2: 256 -> 512   (w2 at rows [0, 256) of w512)
        cp_w512.wait()
        y = jnp.dot(h, w512_v[0:256, :], preferred_element_type=jnp.float32)
        h = jnp.maximum(y + b_v[1:2, 0:512], 0.0).astype(jnp.bfloat16)

        # Layer 3: 512 -> 1024
        cp_w1024.wait()
        y = jnp.dot(h, w1024_v[...], preferred_element_type=jnp.float32)
        h = jnp.maximum(y + b_v[2:3, 0:1024], 0.0).astype(jnp.bfloat16)

        # Layer 4: 1024 -> 512  (w4 at rows [256, 1280) of w512)
        y = jnp.dot(h, w512_v[256:1280, :], preferred_element_type=jnp.float32)
        h = jnp.maximum(y + b_v[3:4, 0:512], 0.0).astype(jnp.bfloat16)

        # Layer 5: 512 -> 256   (w5 at rows [0, 512) of w256)
        y = jnp.dot(h, w256_v[0:512, :], preferred_element_type=jnp.float32)
        h = jnp.maximum(y + b_v[4:5, 0:256], 0.0).astype(jnp.bfloat16)

        # Layer 6: 256 -> 128   (w6 at rows [0, 256) of w128)
        cp_w128.wait()
        y = jnp.dot(h, w128_v[0:256, :], preferred_element_type=jnp.float32)
        h = jnp.maximum(y + b_v[5:6, 0:128], 0.0)                 # f32 (B,128)

        # Layer 7: 128 -> 1 as VPU multiply + lane reduction (avoids an N=1
        # MXU matmul at the kernel tail).  w7 is stored transposed as row 256
        # of the 128-wide pack.
        w7 = w128_v[256:257, :].astype(jnp.float32)               # (1, 128)
        y = jnp.sum(h * w7, axis=-1, keepdims=True) + b_v[6:7, 0:1]
        out_ref[...] = jax.nn.sigmoid(y)

    return mlp_kernel


def pack_params(params):
    """One-time bf16 cast + HBM packing (run OUTSIDE the jitted forward).

    Weights with the same output width are stacked along the row (sublane)
    axis so the kernel can slice them with tile-aligned, zero-cost views:
      w256  = [w5 (512,256) ; w1 (d_in,256)]
      w512  = [w2 (256,512) ; w4 (1024,512)]
      w1024 =  w3 (512,1024)
      w128  = [w6 (256,128) ; w7.T (1,128)]     (head stored transposed)
    Biases stay f32, zero-padded into one (7, 1024) buffer.
    """
    ws = [w.astype(jnp.bfloat16) for w, _ in params]
    bs = [b for _, b in params]
    w1, w2, w3, w4, w5, w6, w7 = ws
    w256 = jnp.concatenate([w5, w1], axis=0)
    w512 = jnp.concatenate([w2, w4], axis=0)
    w1024 = w3
    w128 = jnp.concatenate([w6, w7.T], axis=0)
    bias_pack = jnp.zeros((len(bs), 1024), jnp.float32)
    for i, b in enumerate(bs):
        bias_pack = bias_pack.at[i, :b.shape[1]].set(b[0])
    return (bias_pack, w256, w512, w1024, w128)


@jax.jit
def net_forward(x, bias_pack, w256, w512, w1024, w128):
    """x: (batch, in_features) f32; remaining args from pack_params."""
    batch, in_features = x.shape
    packs = (bias_pack, w256, w512, w1024, w128)

    hbm = pl.BlockSpec(memory_space=pl.ANY)
    vmem = pl.BlockSpec(memory_space=pltpu.MemorySpace.VMEM)

    dims = [in_features] + list(LAYER_DIMS)
    flops = 2 * batch * sum(dims[i] * dims[i + 1] for i in range(len(dims) - 1))
    bytes_accessed = (x.size * x.dtype.itemsize
                      + sum(p.size * p.dtype.itemsize for p in packs)
                      + batch * 4)

    scratch = ([pltpu.VMEM(p.shape, p.dtype) for p in packs]
               + [pltpu.SemaphoreType.DMA((len(packs),))])

    return pl.pallas_call(
        make_mlp_kernel(in_features),
        out_shape=jax.ShapeDtypeStruct((batch, 1), jnp.float32),
        in_specs=[vmem] + [hbm] * len(packs),
        out_specs=vmem,
        scratch_shapes=scratch,
        compiler_params=pltpu.CompilerParams(vmem_limit_bytes=16 << 20),
        cost_estimate=pl.CostEstimate(flops=flops,
                                      transcendentals=batch,
                                      bytes_accessed=bytes_accessed),
    )(x, *packs)


def init_params(key, in_features):
    """Deterministic init matching PyTorch nn.Linear default:
    U(-1/sqrt(fan_in), 1/sqrt(fan_in)) for both W and b. W stored as
    (in, out), i.e. the transpose of nn.Linear.weight."""
    dims = [in_features] + list(LAYER_DIMS)
    params = []
    for i in range(len(dims) - 1):
        fan_in, fan_out = dims[i], dims[i + 1]
        key, kw, kb = jax.random.split(key, 3)
        bound = 1.0 / jnp.sqrt(jnp.float32(fan_in))
        w = jax.random.uniform(kw, (fan_in, fan_out), jnp.float32,
                               minval=-bound, maxval=bound)
        b = jax.random.uniform(kb, (1, fan_out), jnp.float32,
                               minval=-bound, maxval=bound)
        params.append((w, b))
    return params


def reference_forward_bf16(x, params):
    """Plain-JAX reference mirroring the kernel's math exactly (bf16 weights
    and inter-layer activations, f32 accumulate, f32 head reduction)."""
    h = x.astype(jnp.bfloat16)
    n = len(params)
    for i, (w, b) in enumerate(params[:-1]):
        y = jnp.dot(h, w.astype(jnp.bfloat16),
                    preferred_element_type=jnp.float32) + b
        h = jnp.maximum(y, 0.0)
        if i < n - 2:                       # keep layer-6 output in f32
            h = h.astype(jnp.bfloat16)
    w7, b7 = params[-1]
    w7_row = w7.astype(jnp.bfloat16).astype(jnp.float32)[:, 0]     # (128,)
    y = jnp.sum(h * w7_row, axis=-1, keepdims=True) + b7
    return jax.nn.sigmoid(y)


def reference_forward_f32(x, params):
    """Full-f32 reference (loose sanity check for the bf16 cast)."""
    h = x
    n = len(params)
    for i, (w, b) in enumerate(params):
        h = h @ w + b
        if i < n - 1:
            h = jnp.maximum(h, 0.0)
    return jax.nn.sigmoid(h)


if __name__ == "__main__":
    # Matches Net(input_shape=(batch, in_features)); forward flattens to
    # (-1, in_features), which is a no-op for a 2-D input.
    batch, in_features = 8, 32

    key = jax.random.PRNGKey(0)
    key, kx = jax.random.split(key)
    x = jax.random.normal(kx, (batch, in_features), jnp.float32)

    params = init_params(key, in_features)
    packed = pack_params(params)            # one-time cast + pack (not per call)

    out = net_forward(x, *packed)
    out = jax.block_until_ready(out)

    ref_bf16 = reference_forward_bf16(x, params)
    ref_f32 = reference_forward_f32(x, params)

    assert out.shape == (batch, 1), out.shape
    assert jnp.allclose(out, ref_bf16, atol=2e-3, rtol=2e-3), (
        f"max abs err vs bf16 ref {jnp.max(jnp.abs(out - ref_bf16))}")
    assert jnp.allclose(out, ref_f32, atol=5e-2, rtol=5e-2), (
        f"max abs err vs f32 ref {jnp.max(jnp.abs(out - ref_f32))}")

    print("KERNEL_OK")
</pallas_src>

<mosaic_0001>
module attributes {stable_mosaic.version = 11 : i64} {
  func.func @mlp_kernel(%arg0: memref<8x32xf32, #tpu.memory_space<vmem>>, %arg1: memref<7x1024xf32, #tpu.memory_space<any>>, %arg2: memref<544x256xbf16, #tpu.memory_space<any>>, %arg3: memref<1280x512xbf16, #tpu.memory_space<any>>, %arg4: memref<512x1024xbf16, #tpu.memory_space<any>>, %arg5: memref<257x128xbf16, #tpu.memory_space<any>>, %arg6: memref<8x1xf32, #tpu.memory_space<vmem>>, %arg7: memref<7x1024xf32, #tpu.memory_space<vmem>>, %arg8: memref<544x256xbf16, #tpu.memory_space<vmem>>, %arg9: memref<1280x512xbf16, #tpu.memory_space<vmem>>, %arg10: memref<512x1024xbf16, #tpu.memory_space<vmem>>, %arg11: memref<257x128xbf16, #tpu.memory_space<vmem>>, %arg12: memref<5x!tpu.dma_semaphore, #tpu.memory_space<semaphore_mem>>) attributes {dimension_semantics = [], scalar_prefetch = 0 : i64, scratch_operands = 6 : i64, tpu.core_type = #tpu.core_type<tc>} {
    %c0_i32 = arith.constant 0 : i32
    %0 = tpu.memref_slice %arg12[%c0_i32] : memref<5x!tpu.dma_semaphore, #tpu.memory_space<semaphore_mem>> -> memref<1x!tpu.dma_semaphore, #tpu.memory_space<semaphore_mem>>
    %1 = tpu.memref_squeeze %0 : memref<1x!tpu.dma_semaphore, #tpu.memory_space<semaphore_mem>> -> memref<!tpu.dma_semaphore, #tpu.memory_space<semaphore_mem>>
    tpu.enqueue_dma source(%arg2 : memref<544x256xbf16, #tpu.memory_space<any>>) target(%arg8 : memref<544x256xbf16, #tpu.memory_space<vmem>>) target_semaphore(%1 : memref<!tpu.dma_semaphore, #tpu.memory_space<semaphore_mem>>)
    %c1_i32 = arith.constant 1 : i32
    %2 = tpu.memref_slice %arg12[%c1_i32] : memref<5x!tpu.dma_semaphore, #tpu.memory_space<semaphore_mem>> -> memref<1x!tpu.dma_semaphore, #tpu.memory_space<semaphore_mem>>
    %3 = tpu.memref_squeeze %2 : memref<1x!tpu.dma_semaphore, #tpu.memory_space<semaphore_mem>> -> memref<!tpu.dma_semaphore, #tpu.memory_space<semaphore_mem>>
    tpu.enqueue_dma source(%arg1 : memref<7x1024xf32, #tpu.memory_space<any>>) target(%arg7 : memref<7x1024xf32, #tpu.memory_space<vmem>>) target_semaphore(%3 : memref<!tpu.dma_semaphore, #tpu.memory_space<semaphore_mem>>)
    %c2_i32 = arith.constant 2 : i32
    %4 = tpu.memref_slice %arg12[%c2_i32] : memref<5x!tpu.dma_semaphore, #tpu.memory_space<semaphore_mem>> -> memref<1x!tpu.dma_semaphore, #tpu.memory_space<semaphore_mem>>
    %5 = tpu.memref_squeeze %4 : memref<1x!tpu.dma_semaphore, #tpu.memory_space<semaphore_mem>> -> memref<!tpu.dma_semaphore, #tpu.memory_space<semaphore_mem>>
    tpu.enqueue_dma source(%arg3 : memref<1280x512xbf16, #tpu.memory_space<any>>) target(%arg9 : memref<1280x512xbf16, #tpu.memory_space<vmem>>) target_semaphore(%5 : memref<!tpu.dma_semaphore, #tpu.memory_space<semaphore_mem>>)
    %c3_i32 = arith.constant 3 : i32
    %6 = tpu.memref_slice %arg12[%c3_i32] : memref<5x!tpu.dma_semaphore, #tpu.memory_space<semaphore_mem>> -> memref<1x!tpu.dma_semaphore, #tpu.memory_space<semaphore_mem>>
    %7 = tpu.memref_squeeze %6 : memref<1x!tpu.dma_semaphore, #tpu.memory_space<semaphore_mem>> -> memref<!tpu.dma_semaphore, #tpu.memory_space<semaphore_mem>>
    tpu.enqueue_dma source(%arg4 : memref<512x1024xbf16, #tpu.memory_space<any>>) target(%arg10 : memref<512x1024xbf16, #tpu.memory_space<vmem>>) target_semaphore(%7 : memref<!tpu.dma_semaphore, #tpu.memory_space<semaphore_mem>>)
    %c4_i32 = arith.constant 4 : i32
    %8 = tpu.memref_slice %arg12[%c4_i32] : memref<5x!tpu.dma_semaphore, #tpu.memory_space<semaphore_mem>> -> memref<1x!tpu.dma_semaphore, #tpu.memory_space<semaphore_mem>>
    %9 = tpu.memref_squeeze %8 : memref<1x!tpu.dma_semaphore, #tpu.memory_space<semaphore_mem>> -> memref<!tpu.dma_semaphore, #tpu.memory_space<semaphore_mem>>
    tpu.enqueue_dma source(%arg5 : memref<257x128xbf16, #tpu.memory_space<any>>) target(%arg11 : memref<257x128xbf16, #tpu.memory_space<vmem>>) target_semaphore(%9 : memref<!tpu.dma_semaphore, #tpu.memory_space<semaphore_mem>>)
    %c0 = arith.constant 0 : index
    %c0_0 = arith.constant 0 : index
    %10 = vector.load %arg0[%c0, %c0_0] : memref<8x32xf32, #tpu.memory_space<vmem>>, vector<8x32xf32>
    %11 = arith.truncf %10 : vector<8x32xf32> to vector<8x32xbf16>
    %c0_i32_1 = arith.constant 0 : i32
    %12 = tpu.memref_slice %arg12[%c0_i32_1] : memref<5x!tpu.dma_semaphore, #tpu.memory_space<semaphore_mem>> -> memref<1x!tpu.dma_semaphore, #tpu.memory_space<semaphore_mem>>
    %13 = tpu.memref_squeeze %12 : memref<1x!tpu.dma_semaphore, #tpu.memory_space<semaphore_mem>> -> memref<!tpu.dma_semaphore, #tpu.memory_space<semaphore_mem>>
    tpu.wait_dma2 semaphore(%13 : memref<!tpu.dma_semaphore, #tpu.memory_space<semaphore_mem>>) src(%arg2 : memref<544x256xbf16, #tpu.memory_space<any>>) dst(%arg8 : memref<544x256xbf16, #tpu.memory_space<vmem>>)
    %c512 = arith.constant 512 : index
    %c0_2 = arith.constant 0 : index
    %14 = vector.load %arg8[%c512, %c0_2] : memref<544x256xbf16, #tpu.memory_space<vmem>>, vector<32x256xbf16>
    %cst = arith.constant dense<0.000000e+00> : vector<8x256xf32>
    %15 = tpu.matmul %11, %14, %cst {dimension_numbers = #tpu.dot_dimension_numbers<[1], [0], [0], [1], [0, 0, 1, 1], [], []>} : vector<8x32xbf16>, vector<32x256xbf16>, vector<8x256xf32> -> vector<8x256xf32>
    %c1_i32_3 = arith.constant 1 : i32
    %16 = tpu.memref_slice %arg12[%c1_i32_3] : memref<5x!tpu.dma_semaphore, #tpu.memory_space<semaphore_mem>> -> memref<1x!tpu.dma_semaphore, #tpu.memory_space<semaphore_mem>>
    %17 = tpu.memref_squeeze %16 : memref<1x!tpu.dma_semaphore, #tpu.memory_space<semaphore_mem>> -> memref<!tpu.dma_semaphore, #tpu.memory_space<semaphore_mem>>
    tpu.wait_dma2 semaphore(%17 : memref<!tpu.dma_semaphore, #tpu.memory_space<semaphore_mem>>) src(%arg1 : memref<7x1024xf32, #tpu.memory_space<any>>) dst(%arg7 : memref<7x1024xf32, #tpu.memory_space<vmem>>)
    %c0_4 = arith.constant 0 : index
    %c0_5 = arith.constant 0 : index
    %18 = vector.load %arg7[%c0_4, %c0_5] : memref<7x1024xf32, #tpu.memory_space<vmem>>, vector<1x256xf32>
    %19 = vector.broadcast %18 : vector<1x256xf32> to vector<8x256xf32>
    %20 = arith.addf %15, %19 : vector<8x256xf32>
    %cst_6 = arith.constant 0.000000e+00 : f32
    %21 = vector.broadcast %cst_6 : f32 to vector<8x256xf32>
    %22 = arith.maximumf %20, %21 : vector<8x256xf32>
    %23 = arith.truncf %22 : vector<8x256xf32> to vector<8x256xbf16>
    %c2_i32_7 = arith.constant 2 : i32
    %24 = tpu.memref_slice %arg12[%c2_i32_7] : memref<5x!tpu.dma_semaphore, #tpu.memory_space<semaphore_mem>> -> memref<1x!tpu.dma_semaphore, #tpu.memory_space<semaphore_mem>>
    %25 = tpu.memref_squeeze %24 : memref<1x!tpu.dma_semaphore, #tpu.memory_space<semaphore_mem>> -> memref<!tpu.dma_semaphore, #tpu.memory_space<semaphore_mem>>
    tpu.wait_dma2 semaphore(%25 : memref<!tpu.dma_semaphore, #tpu.memory_space<semaphore_mem>>) src(%arg3 : memref<1280x512xbf16, #tpu.memory_space<any>>) dst(%arg9 : memref<1280x512xbf16, #tpu.memory_space<vmem>>)
    %c0_8 = arith.constant 0 : index
    %c0_9 = arith.constant 0 : index
    %26 = vector.load %arg9[%c0_8, %c0_9] : memref<1280x512xbf16, #tpu.memory_space<vmem>>, vector<256x512xbf16>
    %cst_10 = arith.constant dense<0.000000e+00> : vector<8x512xf32>
    %27 = tpu.matmul %23, %26, %cst_10 {dimension_numbers = #tpu.dot_dimension_numbers<[1], [0], [0], [1], [0, 0, 1, 1], [], []>} : vector<8x256xbf16>, vector<256x512xbf16>, vector<8x512xf32> -> vector<8x512xf32>
    %c1 = arith.constant 1 : index
    %c0_11 = arith.constant 0 : index
    %28 = vector.load %arg7[%c1, %c0_11] : memref<7x1024xf32, #tpu.memory_space<vmem>>, vector<1x512xf32>
    %29 = vector.broadcast %28 : vector<1x512xf32> to vector<8x512xf32>
    %30 = arith.addf %27, %29 : vector<8x512xf32>
    %cst_12 = arith.constant 0.000000e+00 : f32
    %31 = vector.broadcast %cst_12 : f32 to vector<8x512xf32>
    %32 = arith.maximumf %30, %31 : vector<8x512xf32>
    %33 = arith.truncf %32 : vector<8x512xf32> to vector<8x512xbf16>
    %c3_i32_13 = arith.constant 3 : i32
    %34 = tpu.memref_slice %arg12[%c3_i32_13] : memref<5x!tpu.dma_semaphore, #tpu.memory_space<semaphore_mem>> -> memref<1x!tpu.dma_semaphore, #tpu.memory_space<semaphore_mem>>
    %35 = tpu.memref_squeeze %34 : memref<1x!tpu.dma_semaphore, #tpu.memory_space<semaphore_mem>> -> memref<!tpu.dma_semaphore, #tpu.memory_space<semaphore_mem>>
    tpu.wait_dma2 semaphore(%35 : memref<!tpu.dma_semaphore, #tpu.memory_space<semaphore_mem>>) src(%arg4 : memref<512x1024xbf16, #tpu.memory_space<any>>) dst(%arg10 : memref<512x1024xbf16, #tpu.memory_space<vmem>>)
    %c0_14 = arith.constant 0 : index
    %c0_15 = arith.constant 0 : index
    %36 = vector.load %arg10[%c0_14, %c0_15] : memref<512x1024xbf16, #tpu.memory_space<vmem>>, vector<512x1024xbf16>
    %cst_16 = arith.constant dense<0.000000e+00> : vector<8x1024xf32>
    %37 = tpu.matmul %33, %36, %cst_16 {dimension_numbers = #tpu.dot_dimension_numbers<[1], [0], [0], [1], [0, 0, 1, 1], [], []>} : vector<8x512xbf16>, vector<512x1024xbf16>, vector<8x1024xf32> -> vector<8x1024xf32>
    %c2 = arith.constant 2 : index
    %c0_17 = arith.constant 0 : index
    %38 = vector.load %arg7[%c2, %c0_17] : memref<7x1024xf32, #tpu.memory_space<vmem>>, vector<1x1024xf32>
    %39 = vector.broadcast %38 : vector<1x1024xf32> to vector<8x1024xf32>
    %40 = arith.addf %37, %39 : vector<8x1024xf32>
    %cst_18 = arith.constant 0.000000e+00 : f32
    %41 = vector.broadcast %cst_18 : f32 to vector<8x1024xf32>
    %42 = arith.maximumf %40, %41 : vector<8x1024xf32>
    %43 = arith.truncf %42 : vector<8x1024xf32> to vector<8x1024xbf16>
    %c256 = arith.constant 256 : index
    %c0_19 = arith.constant 0 : index
    %44 = vector.load %arg9[%c256, %c0_19] : memref<1280x512xbf16, #tpu.memory_space<vmem>>, vector<1024x512xbf16>
    %cst_20 = arith.constant dense<0.000000e+00> : vector<8x512xf32>
    %45 = tpu.matmul %43, %44, %cst_20 {dimension_numbers = #tpu.dot_dimension_numbers<[1], [0], [0], [1], [0, 0, 1, 1], [], []>} : vector<8x1024xbf16>, vector<1024x512xbf16>, vector<8x512xf32> -> vector<8x512xf32>
    %c3 = arith.constant 3 : index
    %c0_21 = arith.constant 0 : index
    %46 = vector.load %arg7[%c3, %c0_21] : memref<7x1024xf32, #tpu.memory_space<vmem>>, vector<1x512xf32>
    %47 = vector.broadcast %46 : vector<1x512xf32> to vector<8x512xf32>
    %48 = arith.addf %45, %47 : vector<8x512xf32>
    %cst_22 = arith.constant 0.000000e+00 : f32
    %49 = vector.broadcast %cst_22 : f32 to vector<8x512xf32>
    %50 = arith.maximumf %48, %49 : vector<8x512xf32>
    %51 = arith.truncf %50 : vector<8x512xf32> to vector<8x512xbf16>
    %c0_23 = arith.constant 0 : index
    %c0_24 = arith.constant 0 : index
    %52 = vector.load %arg8[%c0_23, %c0_24] : memref<544x256xbf16, #tpu.memory_space<vmem>>, vector<512x256xbf16>
    %cst_25 = arith.constant dense<0.000000e+00> : vector<8x256xf32>
    %53 = tpu.matmul %51, %52, %cst_25 {dimension_numbers = #tpu.dot_dimension_numbers<[1], [0], [0], [1], [0, 0, 1, 1], [], []>} : vector<8x512xbf16>, vector<512x256xbf16>, vector<8x256xf32> -> vector<8x256xf32>
    %c4 = arith.constant 4 : index
    %c0_26 = arith.constant 0 : index
    %54 = vector.load %arg7[%c4, %c0_26] : memref<7x1024xf32, #tpu.memory_space<vmem>>, vector<1x256xf32>
    %55 = vector.broadcast %54 : vector<1x256xf32> to vector<8x256xf32>
    %56 = arith.addf %53, %55 : vector<8x256xf32>
    %cst_27 = arith.constant 0.000000e+00 : f32
    %57 = vector.broadcast %cst_27 : f32 to vector<8x256xf32>
    %58 = arith.maximumf %56, %57 : vector<8x256xf32>
    %59 = arith.truncf %58 : vector<8x256xf32> to vector<8x256xbf16>
    %c4_i32_28 = arith.constant 4 : i32
    %60 = tpu.memref_slice %arg12[%c4_i32_28] : memref<5x!tpu.dma_semaphore, #tpu.memory_space<semaphore_mem>> -> memref<1x!tpu.dma_semaphore, #tpu.memory_space<semaphore_mem>>
    %61 = tpu.memref_squeeze %60 : memref<1x!tpu.dma_semaphore, #tpu.memory_space<semaphore_mem>> -> memref<!tpu.dma_semaphore, #tpu.memory_space<semaphore_mem>>
    tpu.wait_dma2 semaphore(%61 : memref<!tpu.dma_semaphore, #tpu.memory_space<semaphore_mem>>) src(%arg5 : memref<257x128xbf16, #tpu.memory_space<any>>) dst(%arg11 : memref<257x128xbf16, #tpu.memory_space<vmem>>)
    %c0_29 = arith.constant 0 : index
    %c0_30 = arith.constant 0 : index
    %62 = vector.load %arg11[%c0_29, %c0_30] : memref<257x128xbf16, #tpu.memory_space<vmem>>, vector<256x128xbf16>
    %cst_31 = arith.constant dense<0.000000e+00> : vector<8x128xf32>
    %63 = tpu.matmul %59, %62, %cst_31 {dimension_numbers = #tpu.dot_dimension_numbers<[1], [0], [0], [1], [0, 0, 1, 1], [], []>} : vector<8x256xbf16>, vector<256x128xbf16>, vector<8x128xf32> -> vector<8x128xf32>
    %c5 = arith.constant 5 : index
    %c0_32 = arith.constant 0 : index
    %64 = vector.load %arg7[%c5, %c0_32] : memref<7x1024xf32, #tpu.memory_space<vmem>>, vector<1x128xf32>
    %65 = vector.broadcast %64 : vector<1x128xf32> to vector<8x128xf32>
    %66 = arith.addf %63, %65 : vector<8x128xf32>
    %cst_33 = arith.constant 0.000000e+00 : f32
    %67 = vector.broadcast %cst_33 : f32 to vector<8x128xf32>
    %68 = arith.maximumf %66, %67 : vector<8x128xf32>
    %c256_34 = arith.constant 256 : index
    %c0_35 = arith.constant 0 : index
    %69 = vector.load %arg11[%c256_34, %c0_35] : memref<257x128xbf16, #tpu.memory_space<vmem>>, vector<1x128xbf16>
    %70 = arith.extf %69 : vector<1x128xbf16> to vector<1x128xf32>
    %71 = vector.broadcast %70 : vector<1x128xf32> to vector<8x128xf32>
    %72 = arith.mulf %68, %71 : vector<8x128xf32>
    %cst_36 = arith.constant dense<0.000000e+00> : vector<8xf32>
    %73 = vector.multi_reduction <add>, %72, %cst_36 [1] : vector<8x128xf32> to vector<8xf32>
    %74 = vector.shape_cast %73 : vector<8xf32> to vector<8x1xf32>
    %c6 = arith.constant 6 : index
    %c0_37 = arith.constant 0 : index
    %75 = vector.load %arg7[%c6, %c0_37] : memref<7x1024xf32, #tpu.memory_space<vmem>>, vector<1x1xf32>
    %76 = vector.broadcast %75 : vector<1x1xf32> to vector<8x1xf32>
    %77 = arith.addf %74, %76 : vector<8x1xf32>
    %78 = arith.negf %77 : vector<8x1xf32>
    %79 = math.exp %78 : vector<8x1xf32>
    %cst_38 = arith.constant 1.000000e+00 : f32
    %80 = vector.broadcast %cst_38 : f32 to vector<8x1xf32>
    %81 = arith.addf %80, %79 : vector<8x1xf32>
    %82 = arith.divf %80, %81 : vector<8x1xf32>
    %c0_39 = arith.constant 0 : index
    %c0_40 = arith.constant 0 : index
    %83 = vector.load %arg6[%c0_39, %c0_40] : memref<8x1xf32, #tpu.memory_space<vmem>>, vector<8x1xf32>
    tpu.vector_store %arg6[%c0_39, %c0_40], %82 {strides = array<i32>} : memref<8x1xf32, #tpu.memory_space<vmem>>, vector<8x1xf32>,
    return
  }
}

</mosaic_0001>

<llo_original>
// kernel: net_forward.1
$region0: #{net_forward.1}
  #allocation0 [shape = 'u32[]', space=smem, size = 0x4, offset = 0x4, fixed_abs, tag = 'smem constant byte address 0x4 - core index']
  #allocation1 [shape = 'u32[144,128]{1,0:T(1,128)}', space=vmem, size = 0x12000, scoped, tag = 'internal scratch']
  #allocation2 [shape = 'f32[7,1024]{1,0:T(8,128)}', space=vmem, size = 0x8000, scoped, tag = 'scratch operand']
  #allocation3 [shape = 'bf16[544,256]{1,0:T(16,128)(2,1)}', space=vmem, size = 0x44000, scoped, tag = 'scratch operand']
  #allocation4 [shape = 'bf16[1280,512]{1,0:T(16,128)(2,1)}', space=vmem, size = 0x140000, scoped, tag = 'scratch operand']
  #allocation5 [shape = 'bf16[512,1024]{1,0:T(16,128)(2,1)}', space=vmem, size = 0x100000, scoped, tag = 'scratch operand']
  #allocation6 [shape = 'bf16[257,128]{1,0:T(8,128)(2,1)}', space=vmem, size = 0x10800, scoped, tag = 'scratch operand']
  #allocation7 [shape = 's32[5]{0}', space=sflag, size = 0x14, scoped, tag = 'scratch operand']
  #allocation10 [shape = 's32[]', space=sflag, size = 0x4, offset = 0, fixed_abs, tag = 'sflag constant byte address 0x0 - dummy sync flag']
  #allocation12 [shape = 's32[]', space=sflag, size = 0x4, offset = 0, fixed_abs, tag = 'sflag constant byte address 0x0 - dummy sync flag']
  #allocation13 [shape = 's32[]', space=sflag, size = 0x4, offset = 0, fixed_abs, tag = 'sflag constant byte address 0x0 - dummy sync flag']
  #allocation14 [shape = 'u32[]', space=smem, size = 0x4, offset = 0x44, fixed_abs, tag = 'smem constant byte address 0x44 - assertion arg 0']
  #allocation15 [shape = 'u32[]', space=smem, size = 0x4, offset = 0x48, fixed_abs, tag = 'smem constant byte address 0x48 - assertion arg 1']
  #allocation16 [shape = 's32[]', space=sflag, size = 0x4, offset = 0, fixed_abs, tag = 'sflag constant byte address 0x0 - dummy sync flag']
  #allocation18 [shape = 's32[]', space=sflag, size = 0x4, offset = 0, fixed_abs, tag = 'sflag constant byte address 0x0 - dummy sync flag']
  #allocation20 [shape = 's32[]', space=sflag, size = 0x4, offset = 0, fixed_abs, tag = 'sflag constant byte address 0x0 - dummy sync flag']
  #allocation21 [shape = 's32[]', space=sflag, size = 0x4, offset = 0, fixed_abs, tag = 'sflag constant byte address 0x0 - dummy sync flag']
  %s0 = inlined_call_operand.hbm [shape: f32[8,32], index: 0, kind: input, shape index: {}]
  %s1 = inlined_call_operand.hbm [shape: f32[7,1024], index: 1, kind: input, shape index: {}]
  %s2 = inlined_call_operand.hbm [shape: bf16[544,256], index: 2, kind: input, shape index: {}]
  %s3 = inlined_call_operand.hbm [shape: bf16[1280,512], index: 3, kind: input, shape index: {}]
  %s4 = inlined_call_operand.hbm [shape: bf16[512,1024], index: 4, kind: input, shape index: {}]
  %s5 = inlined_call_operand.hbm [shape: bf16[257,128], index: 5, kind: input, shape index: {}]
  %s6 = inlined_call_operand.vmem [shape: f32[8,1], index: 6, kind: output, shape index: {}]
  %s7 = sld [smem:[#allocation0]]
  $region26: #{net_forward.1} parent=0
    _
  %s9 = ssub.s32 1, %s7
  %s10 = scalar_select 0, %s9, %s7
  $region1: #{net_forward.1} parent=0
    #allocation8 [shape = 'u8[4096]{0}', space=vmem, size = 0x1000, scoped, tag = 'input window, operand 0, single buffered']
    #allocation9 [shape = 's32[1]{0}', space=sflag, size = 0x4, scoped, tag = 'scoped memory for net_forward.1']
    #allocation11 [shape = 'u32[9]{0}', space=smem, size = 0x24, scoped, tag = 'DMA stride descriptor']
    #allocation17 [shape = 'u32[9]{0}', space=smem, size = 0x24, scoped, tag = 'DMA stride descriptor']
    #allocation19 [shape = 'u32[9]{0}', space=smem, size = 0x24, scoped, tag = 'DMA stride descriptor']
    %11 = vsyncpa [#allocation9], 0
    // Predicated region
    $region2: #{net_forward.1} parent=1 // pred_check
      _
    $region3: #{net_forward.1} parent=1 // pred_check_branch
      %13 = sbr.rel (0) target = $region5
    $region4: #{net_forward.1} parent=1 // pred_region
      %s15 = ssub.s32 128, 128
      %16 = vsyncadd [#allocation9], %s15
      %s18 = sshll.u32 [#allocation8], 4
      %s19 = int_to_ptr.vmem [resolvable:$true] %s18
      %21 = dma.hbm_to_vmem [thread:$0]  %s0, 128, %s19, [#allocation9]
    $region5: #{net_forward.1} parent=1 // pred_fallthru
      _
    // Predicated region
    $region6: #{net_forward.1} parent=1 // pred_check
      _
    $region7: #{net_forward.1} parent=1 // pred_check_branch
      %23 = sbr.rel (0) target = $region9
    $region8: #{net_forward.1} parent=1 // pred_region
      %24 = dma.done [#allocation9], 128
    $region9: #{net_forward.1} parent=1 // pred_fallthru
      _
    %s27 = sshll.u32 1, 14
    %s28 = sxor.u32 4294967295, %s27
    %s30 = sld [smem:[#allocation0]]
    %s31 = sadd.s32 2, %s30
    %s33 = sshll.u32 7, 26
    %s34 = sxor.u32 4294967295, %s33
    %s35 = sand.u32 0, %s34
    %s36 = sshll.u32 %s31, 26
    %s37 = sor.u32 %s35, %s36
    %s38 = sshll.u32 [#allocation3], 4
    %s39 = int_to_ptr.vmem [resolvable:$true] %s38
    %42 = sst [smem:[#allocation11]] 256
    %s43 = scalar_lea.smem [#allocation11], 1
    %44 = sst [smem:[%s43]] 256
    %s45 = scalar_lea.smem [#allocation11], 2
    %46 = sst [smem:[%s45]] 2
    %s47 = scalar_lea.smem [#allocation11], 3
    %48 = sst [smem:[%s47]] 64
    %s49 = scalar_lea.smem [#allocation11], 4
    %50 = sst [smem:[%s49]] 128
    %s51 = scalar_lea.smem [#allocation11], 5
    %52 = sst [smem:[%s51]] 2
    %s53 = scalar_lea.smem [#allocation11], 6
    %54 = sst [smem:[%s53]] 128
    %s55 = scalar_lea.smem [#allocation11], 7
    %56 = sst [smem:[%s55]] 64
    %s57 = scalar_lea.smem [#allocation11], 8
    %58 = sst [smem:[%s57]] 4
    %60 = dma.general %s2, 8704, %s39, [#allocation7], [#allocation10], [#allocation11], %s37, 0
    %s61 = scalar_lea.sflag [#allocation7], 1
    // Predicated region
    $region10: #{net_forward.1} parent=1 // pred_check
      _
    $region11: #{net_forward.1} parent=1 // pred_check_branch
      %63 = sbr.rel target = $region13
    $region12: #{net_forward.1} parent=1 // pred_region
      %64 = sst [smem:[#allocation14]] [#allocation13]
      %65 = sst [smem:[#allocation15]] [#allocation12]
    $region13: #{net_forward.1} parent=1 // pred_fallthru
      _
    %67 = shalt.err (0)
    %s69 = sshll.u32 [#allocation2], 4
    %s70 = int_to_ptr.vmem [resolvable:$true] %s69
    %72 = dma.hbm_to_vmem [thread:$0]  %s1, 1024, %s70, %s61
    %s73 = scalar_lea.sflag [#allocation7], 2
    %s75 = sshll.u32 1, 14
    %s76 = sxor.u32 4294967295, %s75
    %s78 = sadd.s32 2, %s30
    %s80 = sshll.u32 7, 26
    %s81 = sxor.u32 4294967295, %s80
    %s82 = sand.u32 0, %s81
    %s83 = sshll.u32 %s78, 26
    %s84 = sor.u32 %s82, %s83
    %s85 = sshll.u32 [#allocation4], 4
    %s86 = int_to_ptr.vmem [resolvable:$true] %s85
    %89 = sst [smem:[#allocation17]] 512
    %s90 = scalar_lea.smem [#allocation17], 1
    %91 = sst [smem:[%s90]] 512
    %s92 = scalar_lea.smem [#allocation17], 2
    %93 = sst [smem:[%s92]] 4
    %s94 = scalar_lea.smem [#allocation17], 3
    %95 = sst [smem:[%s94]] 64
    %s96 = scalar_lea.smem [#allocation17], 4
    %97 = sst [smem:[%s96]] 128
    %s98 = scalar_lea.smem [#allocation17], 5
    %99 = sst [smem:[%s98]] 2
    %s100 = scalar_lea.smem [#allocation17], 6
    %101 = sst [smem:[%s100]] 256
    %s102 = scalar_lea.smem [#allocation17], 7
    %103 = sst [smem:[%s102]] 64
    %s104 = scalar_lea.smem [#allocation17], 8
    %105 = sst [smem:[%s104]] 4
    %107 = dma.general %s3, 40960, %s86, %s73, [#allocation16], [#allocation17], %s84, 0
    %s108 = scalar_lea.sflag [#allocation7], 3
    %s110 = sshll.u32 1, 14
    %s111 = sxor.u32 4294967295, %s110
    %s113 = sadd.s32 2, %s30
    %s115 = sshll.u32 7, 26
    %s116 = sxor.u32 4294967295, %s115
    %s117 = sand.u32 0, %s116
    %s118 = sshll.u32 %s113, 26
    %s119 = sor.u32 %s117, %s118
    %s120 = sshll.u32 [#allocation5], 4
    %s121 = int_to_ptr.vmem [resolvable:$true] %s120
    %124 = sst [smem:[#allocation19]] 1024
    %s125 = scalar_lea.smem [#allocation19], 1
    %126 = sst [smem:[%s125]] 1024
    %s127 = scalar_lea.smem [#allocation19], 2
    %128 = sst [smem:[%s127]] 8
    %s129 = scalar_lea.smem [#allocation19], 3
    %130 = sst [smem:[%s129]] 64
    %s131 = scalar_lea.smem [#allocation19], 4
    %132 = sst [smem:[%s131]] 128
    %s133 = scalar_lea.smem [#allocation19], 5
    %134 = sst [smem:[%s133]] 2
    %s135 = scalar_lea.smem [#allocation19], 6
    %136 = sst [smem:[%s135]] 512
    %s137 = scalar_lea.smem [#allocation19], 7
    %138 = sst [smem:[%s137]] 64
    %s139 = scalar_lea.smem [#allocation19], 8
    %140 = sst [smem:[%s139]] 4
    %142 = dma.general %s4, 32768, %s121, %s108, [#allocation18], [#allocation19], %s119, 0
    %s143 = scalar_lea.sflag [#allocation7], 4
    // Predicated region
    $region14: #{net_forward.1} parent=1 // pred_check
      _
    $region15: #{net_forward.1} parent=1 // pred_check_branch
      %145 = sbr.rel target = $region17
    $region16: #{net_forward.1} parent=1 // pred_region
      %146 = sst [smem:[#allocation14]] [#allocation21]
      %147 = sst [smem:[#allocation15]] [#allocation20]
    $region17: #{net_forward.1} parent=1 // pred_fallthru
      _
    %149 = shalt.err (0)
    %s151 = sshll.u32 [#allocation6], 4
    %s152 = int_to_ptr.vmem [resolvable:$true] %s151
    %154 = dma.hbm_to_vmem [thread:$0]  %s5, 2112, %s152, %s143
    %v155 = vld [vmem:[#allocation8] sm:$0xff]
    %v156 = vpack.c.bf16 %v155, %v155
    %s157 = smul.u32 4, 68
    %s158 = smul.u32 %s157, 2
    %s159 = sshll.u32 %s158, 4
    %160 = dma.done [#allocation7], %s159
    %v161 = vld [vmem:[#allocation3 + $0x200] sm:$0xff]
    %v162 = vld [vmem:[#allocation3 + $0x208] sm:$0xff]
    %v163 = vld [vmem:[#allocation3 + $0x210] sm:$0xff]
    %v164 = vld [vmem:[#allocation3 + $0x218] sm:$0xff]
    %s165 = smul.u32 8, 1
    %s166 = smul.u32 %s165, 8
    %s167 = sshll.u32 %s166, 4
    %168 = dma.done %s61, %s167
    %v169 = vld [vmem:[#allocation2] ss:$8 sm:$0x3]
    %v171 = vlaneseq
    %v172 = vshrl.u32 %v171, 7
    %v173 = vsub.s32 0, %v172
    %v174 = vrot.slane %v169, %v173
    %v175 = vlaneseq
    %v176 = vshrl.u32 %v175, 7
    %v177 = vsub.s32 1, %v176
    %v178 = vrot.slane %v169, %v177
    %vm181 = vcmask 261120
    %v183 = vsel %vm181, %v156, 0
    %185 = vmatprep.subr.bf16.mxu0 %v162
    %186 = vmatpush1.bf16.msra.mxu0 %v161
    %187 = vmatprep.subr.bf16.mxu0 %v164
    %188 = vmatpush1.bf16.msra.mxu0 %v163
    %189 = vmatprep.subr.bf16.mxu0 0
    %190 = vmatpush1.bf16.msra.mxu0 0
    %191 = vmatprep.subr.bf16.mxu0 0
    %192 = vmatpush1.bf16.msra.mxu0 0
    %193 = vmatprep.subr.bf16.mxu0 0
    %194 = vmatpush1.bf16.msra.mxu0 0
    %195 = vmatprep.subr.bf16.mxu0 0
    %196 = vmatpush1.bf16.msra.mxu0 0
    %197 = vmatprep.subr.bf16.mxu0 0
    %198 = vmatpush1.bf16.msra.mxu0 0
    %199 = vmatprep.subr.bf16.mxu0 0
    %200 = vmatpush1.bf16.msra.mxu0 0
    %201 = vmatprep.subr.bf16.mxu0 0
    %202 = vmatpush1.bf16.msra.mxu0 0
    %203 = vmatprep.subr.bf16.mxu0 0
    %204 = vmatpush1.bf16.msra.mxu0 0
    %205 = vmatprep.subr.bf16.mxu0 0
    %206 = vmatpush1.bf16.msra.mxu0 0
    %207 = vmatprep.subr.bf16.mxu0 0
    %208 = vmatpush1.bf16.msra.mxu0 0
    %209 = vmatprep.subr.bf16.mxu0 0
    %210 = vmatpush1.bf16.msra.mxu0 0
    %211 = vmatprep.subr.bf16.mxu0 0
    %212 = vmatpush1.bf16.msra.mxu0 0
    %213 = vmatprep.subr.bf16.mxu0 0
    %214 = vmatpush1.bf16.msra.mxu0 0
    %215 = vmatprep.subr.bf16.mxu0 0
    %216 = vmatpush1.bf16.msra.mxu0 0
    %217 = vmatprep.mubr.bf16.mxu0 0
    %218 = vmatmul.mubr.bf16.gmra.mrb[0].mxu0 %v183
    %v219 = vpop.f32.mrb[0].mxu0
    %v220 = vadd.f32 %v174, %v219
    %v221 = vpop.f32.mrb[0].mxu0
    %v222 = vadd.f32 %v178, %v221
    %v223 = vpop.f32.mrb[0].mxu0
    %v224 = vpop.f32.mrb[0].mxu0
    %225 = vdwg.mxu0
    %v226 = vmax.f32 %v220, 0.0
    %v227 = vmax.f32 %v222, 0.0
    %v228 = vpack.c.bf16 %v226, %v226
    %v229 = vpack.c.bf16 %v227, %v227
    %s230 = smul.u32 4, 160
    %s231 = smul.u32 %s230, 4
    %s232 = sshll.u32 %s231, 4
    %233 = dma.done %s73, %s232
    %v234 = vld [vmem:[#allocation4] sm:$0xff]
    %v235 = vld [vmem:[#allocation4 + $0x8] sm:$0xff]
    %v236 = vld [vmem:[#allocation4 + $0x10] sm:$0xff]
    %v237 = vld [vmem:[#allocation4 + $0x18] sm:$0xff]
    %v238 = vld [vmem:[#allocation4 + $0x20] sm:$0xff]
    %v239 = vld [vmem:[#allocation4 + $0x28] sm:$0xff]
    %v240 = vld [vmem:[#allocation4 + $0x30] sm:$0xff]
    %v241 = vld [vmem:[#allocation4 + $0x38] sm:$0xff]
    %v242 = vld [vmem:[#allocation4 + $0x40] sm:$0xff]
    %v243 = vld [vmem:[#allocation4 + $0x48] sm:$0xff]
    %v244 = vld [vmem:[#allocation4 + $0x50] sm:$0xff]
    %v245 = vld [vmem:[#allocation4 + $0x58] sm:$0xff]
    %v246 = vld [vmem:[#allocation4 + $0x60] sm:$0xff]
    %v247 = vld [vmem:[#allocation4 + $0x68] sm:$0xff]
    %v248 = vld [vmem:[#allocation4 + $0x70] sm:$0xff]
    %v249 = vld [vmem:[#allocation4 + $0x78] sm:$0xff]
    %v250 = vld [vmem:[#allocation4 + $0x80] sm:$0xff]
    %v251 = vld [vmem:[#allocation4 + $0x88] sm:$0xff]
    %v252 = vld [vmem:[#allocation4 + $0x90] sm:$0xff]
    %v253 = vld [vmem:[#allocation4 + $0x98] sm:$0xff]
    %v254 = vld [vmem:[#allocation4 + $0xa0] sm:$0xff]
    %v255 = vld [vmem:[#allocation4 + $0xa8] sm:$0xff]
    %v256 = vld [vmem:[#allocation4 + $0xb0] sm:$0xff]
    %v257 = vld [vmem:[#allocation4 + $0xb8] sm:$0xff]
    %v258 = vld [vmem:[#allocation4 + $0xc0] sm:$0xff]
    %v259 = vld [vmem:[#allocation4 + $0xc8] sm:$0xff]
    %v260 = vld [vmem:[#allocation4 + $0xd0] sm:$0xff]
    %v261 = vld [vmem:[#allocation4 + $0xd8] sm:$0xff]
    %v262 = vld [vmem:[#allocation4 + $0xe0] sm:$0xff]
    %v263 = vld [vmem:[#allocation4 + $0xe8] sm:$0xff]
    %v264 = vld [vmem:[#allocation4 + $0xf0] sm:$0xff]
    %v265 = vld [vmem:[#allocation4 + $0xf8] sm:$0xff]
    %v266 = vld [vmem:[#allocation4 + $0x100] sm:$0xff]
    %v267 = vld [vmem:[#allocation4 + $0x108] sm:$0xff]
    %v268 = vld [vmem:[#allocation4 + $0x110] sm:$0xff]
    %v269 = vld [vmem:[#allocation4 + $0x118] sm:$0xff]
    %v270 = vld [vmem:[#allocation4 + $0x120] sm:$0xff]
    %v271 = vld [vmem:[#allocation4 + $0x128] sm:$0xff]
    %v272 = vld [vmem:[#allocation4 + $0x130] sm:$0xff]
    %v273 = vld [vmem:[#allocation4 + $0x138] sm:$0xff]
    %v274 = vld [vmem:[#allocation4 + $0x140] sm:$0xff]
    %v275 = vld [vmem:[#allocation4 + $0x148] sm:$0xff]
    %v276 = vld [vmem:[#allocation4 + $0x150] sm:$0xff]
    %v277 = vld [vmem:[#allocation4 + $0x158] sm:$0xff]
    %v278 = vld [vmem:[#allocation4 + $0x160] sm:$0xff]
    %v279 = vld [vmem:[#allocation4 + $0x168] sm:$0xff]
    %v280 = vld [vmem:[#allocation4 + $0x170] sm:$0xff]
    %v281 = vld [vmem:[#allocation4 + $0x178] sm:$0xff]
    %v282 = vld [vmem:[#allocation4 + $0x180] sm:$0xff]
    %v283 = vld [vmem:[#allocation4 + $0x188] sm:$0xff]
    %v284 = vld [vmem:[#allocation4 + $0x190] sm:$0xff]
    %v285 = vld [vmem:[#allocation4 + $0x198] sm:$0xff]
    %v286 = vld [vmem:[#allocation4 + $0x1a0] sm:$0xff]
    %v287 = vld [vmem:[#allocation4 + $0x1a8] sm:$0xff]
    %v288 = vld [vmem:[#allocation4 + $0x1b0] sm:$0xff]
    %v289 = vld [vmem:[#allocation4 + $0x1b8] sm:$0xff]
    %v290 = vld [vmem:[#allocation4 + $0x1c0] sm:$0xff]
    %v291 = vld [vmem:[#allocation4 + $0x1c8] sm:$0xff]
    %v292 = vld [vmem:[#allocation4 + $0x1d0] sm:$0xff]
    %v293 = vld [vmem:[#allocation4 + $0x1d8] sm:$0xff]
    %v294 = vld [vmem:[#allocation4 + $0x1e0] sm:$0xff]
    %v295 = vld [vmem:[#allocation4 + $0x1e8] sm:$0xff]
    %v296 = vld [vmem:[#allocation4 + $0x1f0] sm:$0xff]
    %v297 = vld [vmem:[#allocation4 + $0x1f8] sm:$0xff]
    %s298 = scalar_lea.vmem [#allocation2], 1
    %v299 = vld [vmem:[%s298] ss:$8 sm:$0xf]
    %v301 = vlaneseq
    %v302 = vshrl.u32 %v301, 7
    %v303 = vsub.s32 0, %v302
    %v304 = vrot.slane %v299, %v303
    %v305 = vlaneseq
    %v306 = vshrl.u32 %v305, 7
    %v307 = vsub.s32 1, %v306
    %v308 = vrot.slane %v299, %v307
    %v309 = vlaneseq
    %v310 = vshrl.u32 %v309, 7
    %v311 = vsub.s32 2, %v310
    %v312 = vrot.slane %v299, %v311
    %v313 = vlaneseq
    %v314 = vshrl.u32 %v313, 7
    %v315 = vsub.s32 3, %v314
    %v316 = vrot.slane %v299, %v315
    %321 = vmatprep.subr.bf16.mxu0 %v235
    %322 = vmatpush1.bf16.msra.mxu0 %v234
    %323 = vmatprep.subr.bf16.mxu0 %v239
    %324 = vmatpush1.bf16.msra.mxu0 %v238
    %325 = vmatprep.subr.bf16.mxu0 %v243
    %326 = vmatpush1.bf16.msra.mxu0 %v242
    %327 = vmatprep.subr.bf16.mxu0 %v247
    %328 = vmatpush1.bf16.msra.mxu0 %v246
    %329 = vmatprep.subr.bf16.mxu0 %v251
    %330 = vmatpush1.bf16.msra.mxu0 %v250
    %331 = vmatprep.subr.bf16.mxu0 %v255
    %332 = vmatpush1.bf16.msra.mxu0 %v254
    %333 = vmatprep.subr.bf16.mxu0 %v259
    %334 = vmatpush1.bf16.msra.mxu0 %v258
    %335 = vmatprep.subr.bf16.mxu0 %v263
    %336 = vmatpush1.bf16.msra.mxu0 %v262
    %337 = vmatprep.subr.bf16.mxu0 %v267
    %338 = vmatpush1.bf16.msra.mxu0 %v266
    %339 = vmatprep.subr.bf16.mxu0 %v271
    %340 = vmatpush1.bf16.msra.mxu0 %v270
    %341 = vmatprep.subr.bf16.mxu0 %v275
    %342 = vmatpush1.bf16.msra.mxu0 %v274
    %343 = vmatprep.subr.bf16.mxu0 %v279
    %344 = vmatpush1.bf16.msra.mxu0 %v278
    %345 = vmatprep.subr.bf16.mxu0 %v283
    %346 = vmatpush1.bf16.msra.mxu0 %v282
    %347 = vmatprep.subr.bf16.mxu0 %v287
    %348 = vmatpush1.bf16.msra.mxu0 %v286
    %349 = vmatprep.subr.bf16.mxu0 %v291
    %350 = vmatpush1.bf16.msra.mxu0 %v290
    %351 = vmatprep.subr.bf16.mxu0 %v295
    %352 = vmatpush1.bf16.msra.mxu0 %v294
    %353 = vmatprep.mubr.bf16.mxu0 %v229
    %354 = vmatmul.mubr.bf16.gmra.mrb[0].mxu0 %v228
    %v355 = vpop.f32.mrb[0].mxu0
    %v356 = vadd.f32 %v304, %v355
    %v357 = vpop.f32.mrb[0].mxu0
    %v358 = vadd.f32 %v308, %v357
    %v359 = vpop.f32.mrb[0].mxu0
    %v360 = vpop.f32.mrb[0].mxu0
    %361 = vdwg.mxu0
    %362 = vmatprep.subr.bf16.mxu0 %v237
    %363 = vmatpush1.bf16.msra.mxu0 %v236
    %364 = vmatprep.subr.bf16.mxu0 %v241
    %365 = vmatpush1.bf16.msra.mxu0 %v240
    %366 = vmatprep.subr.bf16.mxu0 %v245
    %367 = vmatpush1.bf16.msra.mxu0 %v244
    %368 = vmatprep.subr.bf16.mxu0 %v249
    %369 = vmatpush1.bf16.msra.mxu0 %v248
    %370 = vmatprep.subr.bf16.mxu0 %v253
    %371 = vmatpush1.bf16.msra.mxu0 %v252
    %372 = vmatprep.subr.bf16.mxu0 %v257
    %373 = vmatpush1.bf16.msra.mxu0 %v256
    %374 = vmatprep.subr.bf16.mxu0 %v261
    %375 = vmatpush1.bf16.msra.mxu0 %v260
    %376 = vmatprep.subr.bf16.mxu0 %v265
    %377 = vmatpush1.bf16.msra.mxu0 %v264
    %378 = vmatprep.subr.bf16.mxu0 %v269
    %379 = vmatpush1.bf16.msra.mxu0 %v268
    %380 = vmatprep.subr.bf16.mxu0 %v273
    %381 = vmatpush1.bf16.msra.mxu0 %v272
    %382 = vmatprep.subr.bf16.mxu0 %v277
    %383 = vmatpush1.bf16.msra.mxu0 %v276
    %384 = vmatprep.subr.bf16.mxu0 %v281
    %385 = vmatpush1.bf16.msra.mxu0 %v280
    %386 = vmatprep.subr.bf16.mxu0 %v285
    %387 = vmatpush1.bf16.msra.mxu0 %v284
    %388 = vmatprep.subr.bf16.mxu0 %v289
    %389 = vmatpush1.bf16.msra.mxu0 %v288
    %390 = vmatprep.subr.bf16.mxu0 %v293
    %391 = vmatpush1.bf16.msra.mxu0 %v292
    %392 = vmatprep.subr.bf16.mxu0 %v297
    %393 = vmatpush1.bf16.msra.mxu0 %v296
    %394 = vmatprep.mubr.bf16.mxu0 %v229
    %395 = vmatmul.mubr.bf16.gmra.mrb[0].mxu0 %v228
    %v396 = vpop.f32.mrb[0].mxu0
    %v397 = vadd.f32 %v312, %v396
    %v398 = vpop.f32.mrb[0].mxu0
    %v399 = vadd.f32 %v316, %v398
    %v400 = vpop.f32.mrb[0].mxu0
    %v401 = vpop.f32.mrb[0].mxu0
    %402 = vdwg.mxu0
    %v403 = vmax.f32 %v356, 0.0
    %v404 = vmax.f32 %v358, 0.0
    %v405 = vmax.f32 %v397, 0.0
    %v406 = vmax.f32 %v399, 0.0
    %v407 = vpack.c.bf16 %v403, %v403
    %v408 = vpack.c.bf16 %v404, %v404
    %v409 = vpack.c.bf16 %v405, %v405
    %v410 = vpack.c.bf16 %v406, %v406
    %s411 = smul.u32 4, 64
    %s412 = smul.u32 %s411, 8
    %s413 = sshll.u32 %s412, 4
    %414 = dma.done %s108, %s413
    %v415 = vld [vmem:[#allocation5] sm:$0xff]
    %v416 = vld [vmem:[#allocation5 + $0x8] sm:$0xff]
    %v417 = vld [vmem:[#allocation5 + $0x10] sm:$0xff]
    %v418 = vld [vmem:[#allocation5 + $0x18] sm:$0xff]
    %v419 = vld [vmem:[#allocation5 + $0x20] sm:$0xff]
    %v420 = vld [vmem:[#allocation5 + $0x28] sm:$0xff]
    %v421 = vld [vmem:[#allocation5 + $0x30] sm:$0xff]
    %v422 = vld [vmem:[#allocation5 + $0x38] sm:$0xff]
    %v423 = vld [vmem:[#allocation5 + $0x40] sm:$0xff]
    %v424 = vld [vmem:[#allocation5 + $0x48] sm:$0xff]
    %v425 = vld [vmem:[#allocation5 + $0x50] sm:$0xff]
    %v426 = vld [vmem:[#allocation5 + $0x58] sm:$0xff]
    %v427 = vld [vmem:[#allocation5 + $0x60] sm:$0xff]
    %v428 = vld [vmem:[#allocation5 + $0x68] sm:$0xff]
    %v429 = vld [vmem:[#allocation5 + $0x70] sm:$0xff]
    %v430 = vld [vmem:[#allocation5 + $0x78] sm:$0xff]
    %v431 = vld [vmem:[#allocation5 + $0x80] sm:$0xff]
    %v432 = vld [vmem:[#allocation5 + $0x88] sm:$0xff]
    %v433 = vld [vmem:[#allocation5 + $0x90] sm:$0xff]
    %v434 = vld [vmem:[#allocation5 + $0x98] sm:$0xff]
    %v435 = vld [vmem:[#allocation5 + $0xa0] sm:$0xff]
    %v436 = vld [vmem:[#allocation5 + $0xa8] sm:$0xff]
    %v437 = vld [vmem:[#allocation5 + $0xb0] sm:$0xff]
    %v438 = vld [vmem:[#allocation5 + $0xb8] sm:$0xff]
    %v439 = vld [vmem:[#allocation5 + $0xc0] sm:$0xff]
    %v440 = vld [vmem:[#allocation5 + $0xc8] sm:$0xff]
    %v441 = vld [vmem:[#allocation5 + $0xd0] sm:$0xff]
    %v442 = vld [vmem:[#allocation5 + $0xd8] sm:$0xff]
    %v443 = vld [vmem:[#allocation5 + $0xe0] sm:$0xff]
    %v444 = vld [vmem:[#allocation5 + $0xe8] sm:$0xff]
    %v445 = vld [vmem:[#allocation5 + $0xf0] sm:$0xff]
    %v446 = vld [vmem:[#allocation5 + $0xf8] sm:$0xff]
    %v447 = vld [vmem:[#allocation5 + $0x100] sm:$0xff]
    %v448 = vld [vmem:[#allocation5 + $0x108] sm:$0xff]
    %v449 = vld [vmem:[#allocation5 + $0x110] sm:$0xff]
    %v450 = vld [vmem:[#allocation5 + $0x118] sm:$0xff]
    %v451 = vld [vmem:[#allocation5 + $0x120] sm:$0xff]
    %v452 = vld [vmem:[#allocation5 + $0x128] sm:$0xff]
    %v453 = vld [vmem:[#allocation5 + $0x130] sm:$0xff]
    %v454 = vld [vmem:[#allocation5 + $0x138] sm:$0xff]
    %v455 = vld [vmem:[#allocation5 + $0x140] sm:$0xff]
    %v456 = vld [vmem:[#allocation5 + $0x148] sm:$0xff]
    %v457 = vld [vmem:[#allocation5 + $0x150] sm:$0xff]
    %v458 = vld [vmem:[#allocation5 + $0x158] sm:$0xff]
    %v459 = vld [vmem:[#allocation5 + $0x160] sm:$0xff]
    %v460 = vld [vmem:[#allocation5 + $0x168] sm:$0xff]
    %v461 = vld [vmem:[#allocation5 + $0x170] sm:$0xff]
    %v462 = vld [vmem:[#allocation5 + $0x178] sm:$0xff]
    %v463 = vld [vmem:[#allocation5 + $0x180] sm:$0xff]
    %v464 = vld [vmem:[#allocation5 + $0x188] sm:$0xff]
    %v465 = vld [vmem:[#allocation5 + $0x190] sm:$0xff]
    %v466 = vld [vmem:[#allocation5 + $0x198] sm:$0xff]
    %v467 = vld [vmem:[#allocation5 + $0x1a0] sm:$0xff]
    %v468 = vld [vmem:[#allocation5 + $0x1a8] sm:$0xff]
    %v469 = vld [vmem:[#allocation5 + $0x1b0] sm:$0xff]
    %v470 = vld [vmem:[#allocation5 + $0x1b8] sm:$0xff]
    %v471 = vld [vmem:[#allocation5 + $0x1c0] sm:$0xff]
    %v472 = vld [vmem:[#allocation5 + $0x1c8] sm:$0xff]
    %v473 = vld [vmem:[#allocation5 + $0x1d0] sm:$0xff]
    %v474 = vld [vmem:[#allocation5 + $0x1d8] sm:$0xff]
    %v475 = vld [vmem:[#allocation5 + $0x1e0] sm:$0xff]
    %v476 = vld [vmem:[#allocation5 + $0x1e8] sm:$0xff]
    %v477 = vld [vmem:[#allocation5 + $0x1f0] sm:$0xff]
    %v478 = vld [vmem:[#allocation5 + $0x1f8] sm:$0xff]
    %v479 = vld [vmem:[#allocation5 + $0x200] sm:$0xff]
    %v480 = vld [vmem:[#allocation5 + $0x208] sm:$0xff]
    %v481 = vld [vmem:[#allocation5 + $0x210] sm:$0xff]
    %v482 = vld [vmem:[#allocation5 + $0x218] sm:$0xff]
    %v483 = vld [vmem:[#allocation5 + $0x220] sm:$0xff]
    %v484 = vld [vmem:[#allocation5 + $0x228] sm:$0xff]
    %v485 = vld [vmem:[#allocation5 + $0x230] sm:$0xff]
    %v486 = vld [vmem:[#allocation5 + $0x238] sm:$0xff]
    %v487 = vld [vmem:[#allocation5 + $0x240] sm:$0xff]
    %v488 = vld [vmem:[#allocation5 + $0x248] sm:$0xff]
    %v489 = vld [vmem:[#allocation5 + $0x250] sm:$0xff]
    %v490 = vld [vmem:[#allocation5 + $0x258] sm:$0xff]
    %v491 = vld [vmem:[#allocation5 + $0x260] sm:$0xff]
    %v492 = vld [vmem:[#allocation5 + $0x268] sm:$0xff]
    %v493 = vld [vmem:[#allocation5 + $0x270] sm:$0xff]
    %v494 = vld [vmem:[#allocation5 + $0x278] sm:$0xff]
    %v495 = vld [vmem:[#allocation5 + $0x280] sm:$0xff]
    %v496 = vld [vmem:[#allocation5 + $0x288] sm:$0xff]
    %v497 = vld [vmem:[#allocation5 + $0x290] sm:$0xff]
    %v498 = vld [vmem:[#allocation5 + $0x298] sm:$0xff]
    %v499 = vld [vmem:[#allocation5 + $0x2a0] sm:$0xff]
    %v500 = vld [vmem:[#allocation5 + $0x2a8] sm:$0xff]
    %v501 = vld [vmem:[#allocation5 + $0x2b0] sm:$0xff]
    %v502 = vld [vmem:[#allocation5 + $0x2b8] sm:$0xff]
    %v503 = vld [vmem:[#allocation5 + $0x2c0] sm:$0xff]
    %v504 = vld [vmem:[#allocation5 + $0x2c8] sm:$0xff]
    %v505 = vld [vmem:[#allocation5 + $0x2d0] sm:$0xff]
    %v506 = vld [vmem:[#allocation5 + $0x2d8] sm:$0xff]
    %v507 = vld [vmem:[#allocation5 + $0x2e0] sm:$0xff]
    %v508 = vld [vmem:[#allocation5 + $0x2e8] sm:$0xff]
    %v509 = vld [vmem:[#allocation5 + $0x2f0] sm:$0xff]
    %v510 = vld [vmem:[#allocation5 + $0x2f8] sm:$0xff]
    %v511 = vld [vmem:[#allocation5 + $0x300] sm:$0xff]
    %v512 = vld [vmem:[#allocation5 + $0x308] sm:$0xff]
    %v513 = vld [vmem:[#allocation5 + $0x310] sm:$0xff]
    %v514 = vld [vmem:[#allocation5 + $0x318] sm:$0xff]
    %v515 = vld [vmem:[#allocation5 + $0x320] sm:$0xff]
    %v516 = vld [vmem:[#allocation5 + $0x328] sm:$0xff]
    %v517 = vld [vmem:[#allocation5 + $0x330] sm:$0xff]
    %v518 = vld [vmem:[#allocation5 + $0x338] sm:$0xff]
    %v519 = vld [vmem:[#allocation5 + $0x340] sm:$0xff]
    %v520 = vld [vmem:[#allocation5 + $0x348] sm:$0xff]
    %v521 = vld [vmem:[#allocation5 + $0x350] sm:$0xff]
    %v522 = vld [vmem:[#allocation5 + $0x358] sm:$0xff]
    %v523 = vld [vmem:[#allocation5 + $0x360] sm:$0xff]
    %v524 = vld [vmem:[#allocation5 + $0x368] sm:$0xff]
    %v525 = vld [vmem:[#allocation5 + $0x370] sm:$0xff]
    %v526 = vld [vmem:[#allocation5 + $0x378] sm:$0xff]
    %v527 = vld [vmem:[#allocation5 + $0x380] sm:$0xff]
    %v528 = vld [vmem:[#allocation5 + $0x388] sm:$0xff]
    %v529 = vld [vmem:[#allocation5 + $0x390] sm:$0xff]
    %v530 = vld [vmem:[#allocation5 + $0x398] sm:$0xff]
    %v531 = vld [vmem:[#allocation5 + $0x3a0] sm:$0xff]
    %v532 = vld [vmem:[#allocation5 + $0x3a8] sm:$0xff]
    %v533 = vld [vmem:[#allocation5 + $0x3b0] sm:$0xff]
    %v534 = vld [vmem:[#allocation5 + $0x3b8] sm:$0xff]
    %v535 = vld [vmem:[#allocation5 + $0x3c0] sm:$0xff]
    %v536 = vld [vmem:[#allocation5 + $0x3c8] sm:$0xff]
    %v537 = vld [vmem:[#allocation5 + $0x3d0] sm:$0xff]
    %v538 = vld [vmem:[#allocation5 + $0x3d8] sm:$0xff]
    %v539 = vld [vmem:[#allocation5 + $0x3e0] sm:$0xff]
    %v540 = vld [vmem:[#allocation5 + $0x3e8] sm:$0xff]
    %v541 = vld [vmem:[#allocation5 + $0x3f0] sm:$0xff]
    %v542 = vld [vmem:[#allocation5 + $0x3f8] sm:$0xff]
    %v543 = vld [vmem:[#allocation5 + $0x400] sm:$0xff]
    %v544 = vld [vmem:[#allocation5 + $0x408] sm:$0xff]
    %v545 = vld [vmem:[#allocation5 + $0x410] sm:$0xff]
    %v546 = vld [vmem:[#allocation5 + $0x418] sm:$0xff]
    %v547 = vld [vmem:[#allocation5 + $0x420] sm:$0xff]
    %v548 = vld [vmem:[#allocation5 + $0x428] sm:$0xff]
    %v549 = vld [vmem:[#allocation5 + $0x430] sm:$0xff]
    %v550 = vld [vmem:[#allocation5 + $0x438] sm:$0xff]
    %v551 = vld [vmem:[#allocation5 + $0x440] sm:$0xff]
    %v552 = vld [vmem:[#allocation5 + $0x448] sm:$0xff]
    %v553 = vld [vmem:[#allocation5 + $0x450] sm:$0xff]
    %v554 = vld [vmem:[#allocation5 + $0x458] sm:$0xff]
    %v555 = vld [vmem:[#allocation5 + $0x460] sm:$0xff]
    %v556 = vld [vmem:[#allocation5 + $0x468] sm:$0xff]
    %v557 = vld [vmem:[#allocation5 + $0x470] sm:$0xff]
    %v558 = vld [vmem:[#allocation5 + $0x478] sm:$0xff]
    %v559 = vld [vmem:[#allocation5 + $0x480] sm:$0xff]
    %v560 = vld [vmem:[#allocation5 + $0x488] sm:$0xff]
    %v561 = vld [vmem:[#allocation5 + $0x490] sm:$0xff]
    %v562 = vld [vmem:[#allocation5 + $0x498] sm:$0xff]
    %v563 = vld [vmem:[#allocation5 + $0x4a0] sm:$0xff]
    %v564 = vld [vmem:[#allocation5 + $0x4a8] sm:$0xff]
    %v565 = vld [vmem:[#allocation5 + $0x4b0] sm:$0xff]
    %v566 = vld [vmem:[#allocation5 + $0x4b8] sm:$0xff]
    %v567 = vld [vmem:[#allocation5 + $0x4c0] sm:$0xff]
    %v568 = vld [vmem:[#allocation5 + $0x4c8] sm:$0xff]
    %v569 = vld [vmem:[#allocation5 + $0x4d0] sm:$0xff]
    %v570 = vld [vmem:[#allocation5 + $0x4d8] sm:$0xff]
    %v571 = vld [vmem:[#allocation5 + $0x4e0] sm:$0xff]
    %v572 = vld [vmem:[#allocation5 + $0x4e8] sm:$0xff]
    %v573 = vld [vmem:[#allocation5 + $0x4f0] sm:$0xff]
    %v574 = vld [vmem:[#allocation5 + $0x4f8] sm:$0xff]
    %v575 = vld [vmem:[#allocation5 + $0x500] sm:$0xff]
    %v576 = vld [vmem:[#allocation5 + $0x508] sm:$0xff]
    %v577 = vld [vmem:[#allocation5 + $0x510] sm:$0xff]
    %v578 = vld [vmem:[#allocation5 + $0x518] sm:$0xff]
    %v579 = vld [vmem:[#allocation5 + $0x520] sm:$0xff]
    %v580 = vld [vmem:[#allocation5 + $0x528] sm:$0xff]
    %v581 = vld [vmem:[#allocation5 + $0x530] sm:$0xff]
    %v582 = vld [vmem:[#allocation5 + $0x538] sm:$0xff]
    %v583 = vld [vmem:[#allocation5 + $0x540] sm:$0xff]
    %v584 = vld [vmem:[#allocation5 + $0x548] sm:$0xff]
    %v585 = vld [vmem:[#allocation5 + $0x550] sm:$0xff]
    %v586 = vld [vmem:[#allocation5 + $0x558] sm:$0xff]
    %v587 = vld [vmem:[#allocation5 + $0x560] sm:$0xff]
    %v588 = vld [vmem:[#allocation5 + $0x568] sm:$0xff]
    %v589 = vld [vmem:[#allocation5 + $0x570] sm:$0xff]
    %v590 = vld [vmem:[#allocation5 + $0x578] sm:$0xff]
    %v591 = vld [vmem:[#allocation5 + $0x580] sm:$0xff]
    %v592 = vld [vmem:[#allocation5 + $0x588] sm:$0xff]
    %v593 = vld [vmem:[#allocation5 + $0x590] sm:$0xff]
    %v594 = vld [vmem:[#allocation5 + $0x598] sm:$0xff]
    %v595 = vld [vmem:[#allocation5 + $0x5a0] sm:$0xff]
    %v596 = vld [vmem:[#allocation5 + $0x5a8] sm:$0xff]
    %v597 = vld [vmem:[#allocation5 + $0x5b0] sm:$0xff]
    %v598 = vld [vmem:[#allocation5 + $0x5b8] sm:$0xff]
    %v599 = vld [vmem:[#allocation5 + $0x5c0] sm:$0xff]
    %v600 = vld [vmem:[#allocation5 + $0x5c8] sm:$0xff]
    %v601 = vld [vmem:[#allocation5 + $0x5d0] sm:$0xff]
    %v602 = vld [vmem:[#allocation5 + $0x5d8] sm:$0xff]
    %v603 = vld [vmem:[#allocation5 + $0x5e0] sm:$0xff]
    %v604 = vld [vmem:[#allocation5 + $0x5e8] sm:$0xff]
    %v605 = vld [vmem:[#allocation5 + $0x5f0] sm:$0xff]
    %v606 = vld [vmem:[#allocation5 + $0x5f8] sm:$0xff]
    %v607 = vld [vmem:[#allocation5 + $0x600] sm:$0xff]
    %v608 = vld [vmem:[#allocation5 + $0x608] sm:$0xff]
    %v609 = vld [vmem:[#allocation5 + $0x610] sm:$0xff]
    %v610 = vld [vmem:[#allocation5 + $0x618] sm:$0xff]
    %v611 = vld [vmem:[#allocation5 + $0x620] sm:$0xff]
    %v612 = vld [vmem:[#allocation5 + $0x628] sm:$0xff]
    %v613 = vld [vmem:[#allocation5 + $0x630] sm:$0xff]
    %v614 = vld [vmem:[#allocation5 + $0x638] sm:$0xff]
    %v615 = vld [vmem:[#allocation5 + $0x640] sm:$0xff]
    %v616 = vld [vmem:[#allocation5 + $0x648] sm:$0xff]
    %v617 = vld [vmem:[#allocation5 + $0x650] sm:$0xff]
    %v618 = vld [vmem:[#allocation5 + $0x658] sm:$0xff]
    %v619 = vld [vmem:[#allocation5 + $0x660] sm:$0xff]
    %v620 = vld [vmem:[#allocation5 + $0x668] sm:$0xff]
    %v621 = vld [vmem:[#allocation5 + $0x670] sm:$0xff]
    %v622 = vld [vmem:[#allocation5 + $0x678] sm:$0xff]
    %v623 = vld [vmem:[#allocation5 + $0x680] sm:$0xff]
    %v624 = vld [vmem:[#allocation5 + $0x688] sm:$0xff]
    %v625 = vld [vmem:[#allocation5 + $0x690] sm:$0xff]
    %v626 = vld [vmem:[#allocation5 + $0x698] sm:$0xff]
    %v627 = vld [vmem:[#allocation5 + $0x6a0] sm:$0xff]
    %v628 = vld [vmem:[#allocation5 + $0x6a8] sm:$0xff]
    %v629 = vld [vmem:[#allocation5 + $0x6b0] sm:$0xff]
    %v630 = vld [vmem:[#allocation5 + $0x6b8] sm:$0xff]
    %v631 = vld [vmem:[#allocation5 + $0x6c0] sm:$0xff]
    %v632 = vld [vmem:[#allocation5 + $0x6c8] sm:$0xff]
    %v633 = vld [vmem:[#allocation5 + $0x6d0] sm:$0xff]
    %v634 = vld [vmem:[#allocation5 + $0x6d8] sm:$0xff]
    %v635 = vld [vmem:[#allocation5 + $0x6e0] sm:$0xff]
    %v636 = vld [vmem:[#allocation5 + $0x6e8] sm:$0xff]
    %v637 = vld [vmem:[#allocation5 + $0x6f0] sm:$0xff]
    %v638 = vld [vmem:[#allocation5 + $0x6f8] sm:$0xff]
    %v639 = vld [vmem:[#allocation5 + $0x700] sm:$0xff]
    %v640 = vld [vmem:[#allocation5 + $0x708] sm:$0xff]
    %v641 = vld [vmem:[#allocation5 + $0x710] sm:$0xff]
    %v642 = vld [vmem:[#allocation5 + $0x718] sm:$0xff]
    %v643 = vld [vmem:[#allocation5 + $0x720] sm:$0xff]
    %v644 = vld [vmem:[#allocation5 + $0x728] sm:$0xff]
    %v645 = vld [vmem:[#allocation5 + $0x730] sm:$0xff]
    %v646 = vld [vmem:[#allocation5 + $0x738] sm:$0xff]
    %v647 = vld [vmem:[#allocation5 + $0x740] sm:$0xff]
    %v648 = vld [vmem:[#allocation5 + $0x748] sm:$0xff]
    %v649 = vld [vmem:[#allocation5 + $0x750] sm:$0xff]
    %v650 = vld [vmem:[#allocation5 + $0x758] sm:$0xff]
    %v651 = vld [vmem:[#allocation5 + $0x760] sm:$0xff]
    %v652 = vld [vmem:[#allocation5 + $0x768] sm:$0xff]
    %v653 = vld [vmem:[#allocation5 + $0x770] sm:$0xff]
    %v654 = vld [vmem:[#allocation5 + $0x778] sm:$0xff]
    %v655 = vld [vmem:[#allocation5 + $0x780] sm:$0xff]
    %v656 = vld [vmem:[#allocation5 + $0x788] sm:$0xff]
    %v657 = vld [vmem:[#allocation5 + $0x790] sm:$0xff]
    %v658 = vld [vmem:[#allocation5 + $0x798] sm:$0xff]
    %v659 = vld [vmem:[#allocation5 + $0x7a0] sm:$0xff]
    %v660 = vld [vmem:[#allocation5 + $0x7a8] sm:$0xff]
    %v661 = vld [vmem:[#allocation5 + $0x7b0] sm:$0xff]
    %v662 = vld [vmem:[#allocation5 + $0x7b8] sm:$0xff]
    %v663 = vld [vmem:[#allocation5 + $0x7c0] sm:$0xff]
    %v664 = vld [vmem:[#allocation5 + $0x7c8] sm:$0xff]
    %v665 = vld [vmem:[#allocation5 + $0x7d0] sm:$0xff]
    %v666 = vld [vmem:[#allocation5 + $0x7d8] sm:$0xff]
    %v667 = vld [vmem:[#allocation5 + $0x7e0] sm:$0xff]
    %v668 = vld [vmem:[#allocation5 + $0x7e8] sm:$0xff]
    %v669 = vld [vmem:[#allocation5 + $0x7f0] sm:$0xff]
    %v670 = vld [vmem:[#allocation5 + $0x7f8] sm:$0xff]
    %s671 = scalar_lea.vmem [#allocation2], 2
    %v672 = vld [vmem:[%s671] ss:$8 sm:$0xf]
    %v673 = vld [vmem:[%s671] ss:$8 sm:$0xf0]
    %v674 = vor.u32 %v672, %v673
    %v676 = vlaneseq
    %v677 = vshrl.u32 %v676, 7
    %v678 = vsub.s32 0, %v677
    %v679 = vrot.slane %v674, %v678
    %v680 = vlaneseq
    %v681 = vshrl.u32 %v680, 7
    %v682 = vsub.s32 1, %v681
    %v683 = vrot.slane %v674, %v682
    %v684 = vlaneseq
    %v685 = vshrl.u32 %v684, 7
    %v686 = vsub.s32 2, %v685
    %v687 = vrot.slane %v674, %v686
    %v688 = vlaneseq
    %v689 = vshrl.u32 %v688, 7
    %v690 = vsub.s32 3, %v689
    %v691 = vrot.slane %v674, %v690
    %v692 = vlaneseq
    %v693 = vshrl.u32 %v692, 7
    %v694 = vsub.s32 4, %v693
    %v695 = vrot.slane %v674, %v694
    %v696 = vlaneseq
    %v697 = vshrl.u32 %v696, 7
    %v698 = vsub.s32 5, %v697
    %v699 = vrot.slane %v674, %v698
    %v700 = vlaneseq
    %v701 = vshrl.u32 %v700, 7
    %v702 = vsub.s32 6, %v701
    %v703 = vrot.slane %v674, %v702
    %v704 = vlaneseq
    %v705 = vshrl.u32 %v704, 7
    %v706 = vsub.s32 7, %v705
    %v707 = vrot.slane %v674, %v706
    %716 = vmatprep.subr.bf16.mxu0 %v416
    %717 = vmatpush1.bf16.msra.mxu0 %v415
    %718 = vmatprep.subr.bf16.mxu0 %v424
    %719 = vmatpush1.bf16.msra.mxu0 %v423
    %720 = vmatprep.subr.bf16.mxu0 %v432
    %721 = vmatpush1.bf16.msra.mxu0 %v431
    %722 = vmatprep.subr.bf16.mxu0 %v440
    %723 = vmatpush1.bf16.msra.mxu0 %v439
    %724 = vmatprep.subr.bf16.mxu0 %v448
    %725 = vmatpush1.bf16.msra.mxu0 %v447
    %726 = vmatprep.subr.bf16.mxu0 %v456
    %727 = vmatpush1.bf16.msra.mxu0 %v455
    %728 = vmatprep.subr.bf16.mxu0 %v464
    %729 = vmatpush1.bf16.msra.mxu0 %v463
    %730 = vmatprep.subr.bf16.mxu0 %v472
    %731 = vmatpush1.bf16.msra.mxu0 %v471
    %732 = vmatprep.subr.bf16.mxu0 %v480
    %733 = vmatpush1.bf16.msra.mxu0 %v479
    %734 = vmatprep.subr.bf16.mxu0 %v488
    %735 = vmatpush1.bf16.msra.mxu0 %v487
    %736 = vmatprep.subr.bf16.mxu0 %v496
    %737 = vmatpush1.bf16.msra.mxu0 %v495
    %738 = vmatprep.subr.bf16.mxu0 %v504
    %739 = vmatpush1.bf16.msra.mxu0 %v503
    %740 = vmatprep.subr.bf16.mxu0 %v512
    %741 = vmatpush1.bf16.msra.mxu0 %v511
    %742 = vmatprep.subr.bf16.mxu0 %v520
    %743 = vmatpush1.bf16.msra.mxu0 %v519
    %744 = vmatprep.subr.bf16.mxu0 %v528
    %745 = vmatpush1.bf16.msra.mxu0 %v527
    %746 = vmatprep.subr.bf16.mxu0 %v536
    %747 = vmatpush1.bf16.msra.mxu0 %v535
    %748 = vmatprep.mubr.bf16.mxu0 %v408
    %749 = vmatmul.mubr.bf16.gmra.mrb[0].mxu0 %v407
    %v750 = vpop.f32.mrb[0].mxu0
    %v751 = vadd.f32 %v679, %v750
    %v752 = vpop.f32.mrb[0].mxu0
    %v753 = vadd.f32 %v683, %v752
    %v754 = vpop.f32.mrb[0].mxu0
    %v755 = vpop.f32.mrb[0].mxu0
    %756 = vdwg.mxu0
    %757 = vmatprep.subr.bf16.mxu0 %v544
    %758 = vmatpush1.bf16.msra.mxu0 %v543
    %759 = vmatprep.subr.bf16.mxu0 %v552
    %760 = vmatpush1.bf16.msra.mxu0 %v551
    %761 = vmatprep.subr.bf16.mxu0 %v560
    %762 = vmatpush1.bf16.msra.mxu0 %v559
    %763 = vmatprep.subr.bf16.mxu0 %v568
    %764 = vmatpush1.bf16.msra.mxu0 %v567
    %765 = vmatprep.subr.bf16.mxu0 %v576
    %766 = vmatpush1.bf16.msra.mxu0 %v575
    %767 = vmatprep.subr.bf16.mxu0 %v584
    %768 = vmatpush1.bf16.msra.mxu0 %v583
    %769 = vmatprep.subr.bf16.mxu0 %v592
    %770 = vmatpush1.bf16.msra.mxu0 %v591
    %771 = vmatprep.subr.bf16.mxu0 %v600
    %772 = vmatpush1.bf16.msra.mxu0 %v599
    %773 = vmatprep.subr.bf16.mxu0 %v608
    %774 = vmatpush1.bf16.msra.mxu0 %v607
    %775 = vmatprep.subr.bf16.mxu0 %v616
    %776 = vmatpush1.bf16.msra.mxu0 %v615
    %777 = vmatprep.subr.bf16.mxu0 %v624
    %778 = vmatpush1.bf16.msra.mxu0 %v623
    %779 = vmatprep.subr.bf16.mxu0 %v632
    %780 = vmatpush1.bf16.msra.mxu0 %v631
    %781 = vmatprep.subr.bf16.mxu0 %v640
    %782 = vmatpush1.bf16.msra.mxu0 %v639
    %783 = vmatprep.subr.bf16.mxu0 %v648
    %784 = vmatpush1.bf16.msra.mxu0 %v647
    %785 = vmatprep.subr.bf16.mxu0 %v656
    %786 = vmatpush1.bf16.msra.mxu0 %v655
    %787 = vmatprep.subr.bf16.mxu0 %v664
    %788 = vmatpush1.bf16.msra.mxu0 %v663
    %789 = vmatprep.mubr.bf16.mxu0 %v410
    %790 = vmatmul.mubr.bf16.gmra.mrb[0].mxu0 %v409
    %v791 = vpop.f32.mrb[0].mxu0
    %v792 = vadd.f32 %v751, %v791
    %v793 = vpop.f32.mrb[0].mxu0
    %v794 = vadd.f32 %v753, %v793
    %v795 = vpop.f32.mrb[0].mxu0
    %v796 = vpop.f32.mrb[0].mxu0
    %797 = vdwg.mxu0
    %798 = vmatprep.subr.bf16.mxu0 %v418
    %799 = vmatpush1.bf16.msra.mxu0 %v417
    %800 = vmatprep.subr.bf16.mxu0 %v426
    %801 = vmatpush1.bf16.msra.mxu0 %v425
    %802 = vmatprep.subr.bf16.mxu0 %v434
    %803 = vmatpush1.bf16.msra.mxu0 %v433
    %804 = vmatprep.subr.bf16.mxu0 %v442
    %805 = vmatpush1.bf16.msra.mxu0 %v441
    %806 = vmatprep.subr.bf16.mxu0 %v450
    %807 = vmatpush1.bf16.msra.mxu0 %v449
    %808 = vmatprep.subr.bf16.mxu0 %v458
    %809 = vmatpush1.bf16.msra.mxu0 %v457
    %810 = vmatprep.subr.bf16.mxu0 %v466
    %811 = vmatpush1.bf16.msra.mxu0 %v465
    %812 = vmatprep.subr.bf16.mxu0 %v474
    %813 = vmatpush1.bf16.msra.mxu0 %v473
    %814 = vmatprep.subr.bf16.mxu0 %v482
    %815 = vmatpush1.bf16.msra.mxu0 %v481
    %816 = vmatprep.subr.bf16.mxu0 %v490
    %817 = vmatpush1.bf16.msra.mxu0 %v489
    %818 = vmatprep.subr.bf16.mxu0 %v498
    %819 = vmatpush1.bf16.msra.mxu0 %v497
    %820 = vmatprep.subr.bf16.mxu0 %v506
    %821 = vmatpush1.bf16.msra.mxu0 %v505
    %822 = vmatprep.subr.bf16.mxu0 %v514
    %823 = vmatpush1.bf16.msra.mxu0 %v513
    %824 = vmatprep.subr.bf16.mxu0 %v522
    %825 = vmatpush1.bf16.msra.mxu0 %v521
    %826 = vmatprep.subr.bf16.mxu0 %v530
    %827 = vmatpush1.bf16.msra.mxu0 %v529
    %828 = vmatprep.subr.bf16.mxu0 %v538
    %829 = vmatpush1.bf16.msra.mxu0 %v537
    %830 = vmatprep.mubr.bf16.mxu0 %v408
    %831 = vmatmul.mubr.bf16.gmra.mrb[0].mxu0 %v407
    %v832 = vpop.f32.mrb[0].mxu0
    %v833 = vadd.f32 %v687, %v832
    %v834 = vpop.f32.mrb[0].mxu0
    %v835 = vadd.f32 %v691, %v834
    %v836 = vpop.f32.mrb[0].mxu0
    %v837 = vpop.f32.mrb[0].mxu0
    %838 = vdwg.mxu0
    %839 = vmatprep.subr.bf16.mxu0 %v546
    %840 = vmatpush1.bf16.msra.mxu0 %v545
    %841 = vmatprep.subr.bf16.mxu0 %v554
    %842 = vmatpush1.bf16.msra.mxu0 %v553
    %843 = vmatprep.subr.bf16.mxu0 %v562
    %844 = vmatpush1.bf16.msra.mxu0 %v561
    %845 = vmatprep.subr.bf16.mxu0 %v570
    %846 = vmatpush1.bf16.msra.mxu0 %v569
    %847 = vmatprep.subr.bf16.mxu0 %v578
    %848 = vmatpush1.bf16.msra.mxu0 %v577
    %849 = vmatprep.subr.bf16.mxu0 %v586
    %850 = vmatpush1.bf16.msra.mxu0 %v585
    %851 = vmatprep.subr.bf16.mxu0 %v594
    %852 = vmatpush1.bf16.msra.mxu0 %v593
    %853 = vmatprep.subr.bf16.mxu0 %v602
    %854 = vmatpush1.bf16.msra.mxu0 %v601
    %855 = vmatprep.subr.bf16.mxu0 %v610
    %856 = vmatpush1.bf16.msra.mxu0 %v609
    %857 = vmatprep.subr.bf16.mxu0 %v618
    %858 = vmatpush1.bf16.msra.mxu0 %v617
    %859 = vmatprep.subr.bf16.mxu0 %v626
    %860 = vmatpush1.bf16.msra.mxu0 %v625
    %861 = vmatprep.subr.bf16.mxu0 %v634
    %862 = vmatpush1.bf16.msra.mxu0 %v633
    %863 = vmatprep.subr.bf16.mxu0 %v642
    %864 = vmatpush1.bf16.msra.mxu0 %v641
    %865 = vmatprep.subr.bf16.mxu0 %v650
    %866 = vmatpush1.bf16.msra.mxu0 %v649
    %867 = vmatprep.subr.bf16.mxu0 %v658
    %868 = vmatpush1.bf16.msra.mxu0 %v657
    %869 = vmatprep.subr.bf16.mxu0 %v666
    %870 = vmatpush1.bf16.msra.mxu0 %v665
    %871 = vmatprep.mubr.bf16.mxu0 %v410
    %872 = vmatmul.mubr.bf16.gmra.mrb[0].mxu0 %v409
    %v873 = vpop.f32.mrb[0].mxu0
    %v874 = vadd.f32 %v833, %v873
    %v875 = vpop.f32.mrb[0].mxu0
    %v876 = vadd.f32 %v835, %v875
    %v877 = vpop.f32.mrb[0].mxu0
    %v878 = vpop.f32.mrb[0].mxu0
    %879 = vdwg.mxu0
    %880 = vmatprep.subr.bf16.mxu0 %v420
    %881 = vmatpush1.bf16.msra.mxu0 %v419
    %882 = vmatprep.subr.bf16.mxu0 %v428
    %883 = vmatpush1.bf16.msra.mxu0 %v427
    %884 = vmatprep.subr.bf16.mxu0 %v436
    %885 = vmatpush1.bf16.msra.mxu0 %v435
    %886 = vmatprep.subr.bf16.mxu0 %v444
    %887 = vmatpush1.bf16.msra.mxu0 %v443
    %888 = vmatprep.subr.bf16.mxu0 %v452
    %889 = vmatpush1.bf16.msra.mxu0 %v451
    %890 = vmatprep.subr.bf16.mxu0 %v460
    %891 = vmatpush1.bf16.msra.mxu0 %v459
    %892 = vmatprep.subr.bf16.mxu0 %v468
    %893 = vmatpush1.bf16.msra.mxu0 %v467
    %894 = vmatprep.subr.bf16.mxu0 %v476
    %895 = vmatpush1.bf16.msra.mxu0 %v475
    %896 = vmatprep.subr.bf16.mxu0 %v484
    %897 = vmatpush1.bf16.msra.mxu0 %v483
    %898 = vmatprep.subr.bf16.mxu0 %v492
    %899 = vmatpush1.bf16.msra.mxu0 %v491
    %900 = vmatprep.subr.bf16.mxu0 %v500
    %901 = vmatpush1.bf16.msra.mxu0 %v499
    %902 = vmatprep.subr.bf16.mxu0 %v508
    %903 = vmatpush1.bf16.msra.mxu0 %v507
    %904 = vmatprep.subr.bf16.mxu0 %v516
    %905 = vmatpush1.bf16.msra.mxu0 %v515
    %906 = vmatprep.subr.bf16.mxu0 %v524
    %907 = vmatpush1.bf16.msra.mxu0 %v523
    %908 = vmatprep.subr.bf16.mxu0 %v532
    %909 = vmatpush1.bf16.msra.mxu0 %v531
    %910 = vmatprep.subr.bf16.mxu0 %v540
    %911 = vmatpush1.bf16.msra.mxu0 %v539
    %912 = vmatprep.mubr.bf16.mxu0 %v408
    %913 = vmatmul.mubr.bf16.gmra.mrb[0].mxu0 %v407
    %v914 = vpop.f32.mrb[0].mxu0
    %v915 = vadd.f32 %v695, %v914
    %v916 = vpop.f32.mrb[0].mxu0
    %v917 = vadd.f32 %v699, %v916
    %v918 = vpop.f32.mrb[0].mxu0
    %v919 = vpop.f32.mrb[0].mxu0
    %920 = vdwg.mxu0
    %921 = vmatprep.subr.bf16.mxu0 %v548
    %922 = vmatpush1.bf16.msra.mxu0 %v547
    %923 = vmatprep.subr.bf16.mxu0 %v556
    %924 = vmatpush1.bf16.msra.mxu0 %v555
    %925 = vmatprep.subr.bf16.mxu0 %v564
    %926 = vmatpush1.bf16.msra.mxu0 %v563
    %927 = vmatprep.subr.bf16.mxu0 %v572
    %928 = vmatpush1.bf16.msra.mxu0 %v571
    %929 = vmatprep.subr.bf16.mxu0 %v580
    %930 = vmatpush1.bf16.msra.mxu0 %v579
    %931 = vmatprep.subr.bf16.mxu0 %v588
    %932 = vmatpush1.bf16.msra.mxu0 %v587
    %933 = vmatprep.subr.bf16.mxu0 %v596
    %934 = vmatpush1.bf16.msra.mxu0 %v595
    %935 = vmatprep.subr.bf16.mxu0 %v604
    %936 = vmatpush1.bf16.msra.mxu0 %v603
    %937 = vmatprep.subr.bf16.mxu0 %v612
    %938 = vmatpush1.bf16.msra.mxu0 %v611
    %939 = vmatprep.subr.bf16.mxu0 %v620
    %940 = vmatpush1.bf16.msra.mxu0 %v619
    %941 = vmatprep.subr.bf16.mxu0 %v628
    %942 = vmatpush1.bf16.msra.mxu0 %v627
    %943 = vmatprep.subr.bf16.mxu0 %v636
    %944 = vmatpush1.bf16.msra.mxu0 %v635
    %945 = vmatprep.subr.bf16.mxu0 %v644
    %946 = vmatpush1.bf16.msra.mxu0 %v643
    %947 = vmatprep.subr.bf16.mxu0 %v652
    %948 = vmatpush1.bf16.msra.mxu0 %v651
    %949 = vmatprep.subr.bf16.mxu0 %v660
    %950 = vmatpush1.bf16.msra.mxu0 %v659
    %951 = vmatprep.subr.bf16.mxu0 %v668
    %952 = vmatpush1.bf16.msra.mxu0 %v667
    %953 = vmatprep.mubr.bf16.mxu0 %v410
    %954 = vmatmul.mubr.bf16.gmra.mrb[0].mxu0 %v409
    %v955 = vpop.f32.mrb[0].mxu0
    %v956 = vadd.f32 %v915, %v955
    %v957 = vpop.f32.mrb[0].mxu0
    %v958 = vadd.f32 %v917, %v957
    %v959 = vpop.f32.mrb[0].mxu0
    %v960 = vpop.f32.mrb[0].mxu0
    %961 = vdwg.mxu0
    %962 = vmatprep.subr.bf16.mxu0 %v422
    %963 = vmatpush1.bf16.msra.mxu0 %v421
    %964 = vmatprep.subr.bf16.mxu0 %v430
    %965 = vmatpush1.bf16.msra.mxu0 %v429
    %966 = vmatprep.subr.bf16.mxu0 %v438
    %967 = vmatpush1.bf16.msra.mxu0 %v437
    %968 = vmatprep.subr.bf16.mxu0 %v446
    %969 = vmatpush1.bf16.msra.mxu0 %v445
    %970 = vmatprep.subr.bf16.mxu0 %v454
    %971 = vmatpush1.bf16.msra.mxu0 %v453
    %972 = vmatprep.subr.bf16.mxu0 %v462
    %973 = vmatpush1.bf16.msra.mxu0 %v461
    %974 = vmatprep.subr.bf16.mxu0 %v470
    %975 = vmatpush1.bf16.msra.mxu0 %v469
    %976 = vmatprep.subr.bf16.mxu0 %v478
    %977 = vmatpush1.bf16.msra.mxu0 %v477
    %978 = vmatprep.subr.bf16.mxu0 %v486
    %979 = vmatpush1.bf16.msra.mxu0 %v485
    %980 = vmatprep.subr.bf16.mxu0 %v494
    %981 = vmatpush1.bf16.msra.mxu0 %v493
    %982 = vmatprep.subr.bf16.mxu0 %v502
    %983 = vmatpush1.bf16.msra.mxu0 %v501
    %984 = vmatprep.subr.bf16.mxu0 %v510
    %985 = vmatpush1.bf16.msra.mxu0 %v509
    %986 = vmatprep.subr.bf16.mxu0 %v518
    %987 = vmatpush1.bf16.msra.mxu0 %v517
    %988 = vmatprep.subr.bf16.mxu0 %v526
    %989 = vmatpush1.bf16.msra.mxu0 %v525
    %990 = vmatprep.subr.bf16.mxu0 %v534
    %991 = vmatpush1.bf16.msra.mxu0 %v533
    %992 = vmatprep.subr.bf16.mxu0 %v542
    %993 = vmatpush1.bf16.msra.mxu0 %v541
    %994 = vmatprep.mubr.bf16.mxu0 %v408
    %995 = vmatmul.mubr.bf16.gmra.mrb[0].mxu0 %v407
    %v996 = vpop.f32.mrb[0].mxu0
    %v997 = vadd.f32 %v703, %v996
    %v998 = vpop.f32.mrb[0].mxu0
    %v999 = vadd.f32 %v707, %v998
    %v1000 = vpop.f32.mrb[0].mxu0
    %v1001 = vpop.f32.mrb[0].mxu0
    %1002 = vdwg.mxu0
    %1003 = vmatprep.subr.bf16.mxu0 %v550
    %1004 = vmatpush1.bf16.msra.mxu0 %v549
    %1005 = vmatprep.subr.bf16.mxu0 %v558
    %1006 = vmatpush1.bf16.msra.mxu0 %v557
    %1007 = vmatprep.subr.bf16.mxu0 %v566
    %1008 = vmatpush1.bf16.msra.mxu0 %v565
    %1009 = vmatprep.subr.bf16.mxu0 %v574
    %1010 = vmatpush1.bf16.msra.mxu0 %v573
    %1011 = vmatprep.subr.bf16.mxu0 %v582
    %1012 = vmatpush1.bf16.msra.mxu0 %v581
    %1013 = vmatprep.subr.bf16.mxu0 %v590
    %1014 = vmatpush1.bf16.msra.mxu0 %v589
    %1015 = vmatprep.subr.bf16.mxu0 %v598
    %1016 = vmatpush1.bf16.msra.mxu0 %v597
    %1017 = vmatprep.subr.bf16.mxu0 %v606
    %1018 = vmatpush1.bf16.msra.mxu0 %v605
    %1019 = vmatprep.subr.bf16.mxu0 %v614
    %1020 = vmatpush1.bf16.msra.mxu0 %v613
    %1021 = vmatprep.subr.bf16.mxu0 %v622
    %1022 = vmatpush1.bf16.msra.mxu0 %v621
    %1023 = vmatprep.subr.bf16.mxu0 %v630
    %1024 = vmatpush1.bf16.msra.mxu0 %v629
    %1025 = vmatprep.subr.bf16.mxu0 %v638
    %1026 = vmatpush1.bf16.msra.mxu0 %v637
    %1027 = vmatprep.subr.bf16.mxu0 %v646
    %1028 = vmatpush1.bf16.msra.mxu0 %v645
    %1029 = vmatprep.subr.bf16.mxu0 %v654
    %1030 = vmatpush1.bf16.msra.mxu0 %v653
    %1031 = vmatprep.subr.bf16.mxu0 %v662
    %1032 = vmatpush1.bf16.msra.mxu0 %v661
    %1033 = vmatprep.subr.bf16.mxu0 %v670
    %1034 = vmatpush1.bf16.msra.mxu0 %v669
    %1035 = vmatprep.mubr.bf16.mxu0 %v410
    %1036 = vmatmul.mubr.bf16.gmra.mrb[0].mxu0 %v409
    %v1037 = vpop.f32.mrb[0].mxu0
    %v1038 = vadd.f32 %v997, %v1037
    %v1039 = vpop.f32.mrb[0].mxu0
    %v1040 = vadd.f32 %v999, %v1039
    %v1041 = vpop.f32.mrb[0].mxu0
    %v1042 = vpop.f32.mrb[0].mxu0
    %1043 = vdwg.mxu0
    %v1044 = vmax.f32 %v792, 0.0
    %v1045 = vmax.f32 %v794, 0.0
    %v1046 = vmax.f32 %v874, 0.0
    %v1047 = vmax.f32 %v876, 0.0
    %v1048 = vmax.f32 %v956, 0.0
    %v1049 = vmax.f32 %v958, 0.0
    %v1050 = vmax.f32 %v1038, 0.0
    %v1051 = vmax.f32 %v1040, 0.0
    %v1052 = vpack.c.bf16 %v1044, %v1044
    %v1053 = vpack.c.bf16 %v1045, %v1045
    %v1054 = vpack.c.bf16 %v1046, %v1046
    %v1055 = vpack.c.bf16 %v1047, %v1047
    %v1056 = vpack.c.bf16 %v1048, %v1048
    %v1057 = vpack.c.bf16 %v1049, %v1049
    %v1058 = vpack.c.bf16 %v1050, %v1050
    %v1059 = vpack.c.bf16 %v1051, %v1051
    %v1060 = vld [vmem:[#allocation4 + $0x200] sm:$0xff]
    %v1061 = vld [vmem:[#allocation4 + $0x208] sm:$0xff]
    %v1062 = vld [vmem:[#allocation4 + $0x210] sm:$0xff]
    %v1063 = vld [vmem:[#allocation4 + $0x218] sm:$0xff]
    %v1064 = vld [vmem:[#allocation4 + $0x220] sm:$0xff]
    %v1065 = vld [vmem:[#allocation4 + $0x228] sm:$0xff]
    %v1066 = vld [vmem:[#allocation4 + $0x230] sm:$0xff]
    %v1067 = vld [vmem:[#allocation4 + $0x238] sm:$0xff]
    %v1068 = vld [vmem:[#allocation4 + $0x240] sm:$0xff]
    %v1069 = vld [vmem:[#allocation4 + $0x248] sm:$0xff]
    %v1070 = vld [vmem:[#allocation4 + $0x250] sm:$0xff]
    %v1071 = vld [vmem:[#allocation4 + $0x258] sm:$0xff]
    %v1072 = vld [vmem:[#allocation4 + $0x260] sm:$0xff]
    %v1073 = vld [vmem:[#allocation4 + $0x268] sm:$0xff]
    %v1074 = vld [vmem:[#allocation4 + $0x270] sm:$0xff]
    %v1075 = vld [vmem:[#allocation4 + $0x278] sm:$0xff]
    %v1076 = vld [vmem:[#allocation4 + $0x280] sm:$0xff]
    %v1077 = vld [vmem:[#allocation4 + $0x288] sm:$0xff]
    %v1078 = vld [vmem:[#allocation4 + $0x290] sm:$0xff]
    %v1079 = vld [vmem:[#allocation4 + $0x298] sm:$0xff]
    %v1080 = vld [vmem:[#allocation4 + $0x2a0] sm:$0xff]
    %v1081 = vld [vmem:[#allocation4 + $0x2a8] sm:$0xff]
    %v1082 = vld [vmem:[#allocation4 + $0x2b0] sm:$0xff]
    %v1083 = vld [vmem:[#allocation4 + $0x2b8] sm:$0xff]
    %v1084 = vld [vmem:[#allocation4 + $0x2c0] sm:$0xff]
    %v1085 = vld [vmem:[#allocation4 + $0x2c8] sm:$0xff]
    %v1086 = vld [vmem:[#allocation4 + $0x2d0] sm:$0xff]
    %v1087 = vld [vmem:[#allocation4 + $0x2d8] sm:$0xff]
    %v1088 = vld [vmem:[#allocation4 + $0x2e0] sm:$0xff]
    %v1089 = vld [vmem:[#allocation4 + $0x2e8] sm:$0xff]
    %v1090 = vld [vmem:[#allocation4 + $0x2f0] sm:$0xff]
    %v1091 = vld [vmem:[#allocation4 + $0x2f8] sm:$0xff]
    %v1092 = vld [vmem:[#allocation4 + $0x300] sm:$0xff]
    %v1093 = vld [vmem:[#allocation4 + $0x308] sm:$0xff]
    %v1094 = vld [vmem:[#allocation4 + $0x310] sm:$0xff]
    %v1095 = vld [vmem:[#allocation4 + $0x318] sm:$0xff]
    %v1096 = vld [vmem:[#allocation4 + $0x320] sm:$0xff]
    %v1097 = vld [vmem:[#allocation4 + $0x328] sm:$0xff]
    %v1098 = vld [vmem:[#allocation4 + $0x330] sm:$0xff]
    %v1099 = vld [vmem:[#allocation4 + $0x338] sm:$0xff]
    %v1100 = vld [vmem:[#allocation4 + $0x340] sm:$0xff]
    %v1101 = vld [vmem:[#allocation4 + $0x348] sm:$0xff]
    %v1102 = vld [vmem:[#allocation4 + $0x350] sm:$0xff]
    %v1103 = vld [vmem:[#allocation4 + $0x358] sm:$0xff]
    %v1104 = vld [vmem:[#allocation4 + $0x360] sm:$0xff]
    %v1105 = vld [vmem:[#allocation4 + $0x368] sm:$0xff]
    %v1106 = vld [vmem:[#allocation4 + $0x370] sm:$0xff]
    %v1107 = vld [vmem:[#allocation4 + $0x378] sm:$0xff]
    %v1108 = vld [vmem:[#allocation4 + $0x380] sm:$0xff]
    %v1109 = vld [vmem:[#allocation4 + $0x388] sm:$0xff]
    %v1110 = vld [vmem:[#allocation4 + $0x390] sm:$0xff]
    %v1111 = vld [vmem:[#allocation4 + $0x398] sm:$0xff]
    %v1112 = vld [vmem:[#allocation4 + $0x3a0] sm:$0xff]
    %v1113 = vld [vmem:[#allocation4 + $0x3a8] sm:$0xff]
    %v1114 = vld [vmem:[#allocation4 + $0x3b0] sm:$0xff]
    %v1115 = vld [vmem:[#allocation4 + $0x3b8] sm:$0xff]
    %v1116 = vld [vmem:[#allocation4 + $0x3c0] sm:$0xff]
    %v1117 = vld [vmem:[#allocation4 + $0x3c8] sm:$0xff]
    %v1118 = vld [vmem:[#allocation4 + $0x3d0] sm:$0xff]
    %v1119 = vld [vmem:[#allocation4 + $0x3d8] sm:$0xff]
    %v1120 = vld [vmem:[#allocation4 + $0x3e0] sm:$0xff]
    %v1121 = vld [vmem:[#allocation4 + $0x3e8] sm:$0xff]
    %v1122 = vld [vmem:[#allocation4 + $0x3f0] sm:$0xff]
    %v1123 = vld [vmem:[#allocation4 + $0x3f8] sm:$0xff]
    %v1124 = vld [vmem:[#allocation4 + $0x400] sm:$0xff]
    %v1125 = vld [vmem:[#allocation4 + $0x408] sm:$0xff]
    %v1126 = vld [vmem:[#allocation4 + $0x410] sm:$0xff]
    %v1127 = vld [vmem:[#allocation4 + $0x418] sm:$0xff]
    %v1128 = vld [vmem:[#allocation4 + $0x420] sm:$0xff]
    %v1129 = vld [vmem:[#allocation4 + $0x428] sm:$0xff]
    %v1130 = vld [vmem:[#allocation4 + $0x430] sm:$0xff]
    %v1131 = vld [vmem:[#allocation4 + $0x438] sm:$0xff]
    %v1132 = vld [vmem:[#allocation4 + $0x440] sm:$0xff]
    %v1133 = vld [vmem:[#allocation4 + $0x448] sm:$0xff]
    %v1134 = vld [vmem:[#allocation4 + $0x450] sm:$0xff]
    %v1135 = vld [vmem:[#allocation4 + $0x458] sm:$0xff]
    %v1136 = vld [vmem:[#allocation4 + $0x460] sm:$0xff]
    %v1137 = vld [vmem:[#allocation4 + $0x468] sm:$0xff]
    %v1138 = vld [vmem:[#allocation4 + $0x470] sm:$0xff]
    %v1139 = vld [vmem:[#allocation4 + $0x478] sm:$0xff]
    %v1140 = vld [vmem:[#allocation4 + $0x480] sm:$0xff]
    %v1141 = vld [vmem:[#allocation4 + $0x488] sm:$0xff]
    %v1142 = vld [vmem:[#allocation4 + $0x490] sm:$0xff]
    %v1143 = vld [vmem:[#allocation4 + $0x498] sm:$0xff]
    %v1144 = vld [vmem:[#allocation4 + $0x4a0] sm:$0xff]
    %v1145 = vld [vmem:[#allocation4 + $0x4a8] sm:$0xff]
    %v1146 = vld [vmem:[#allocation4 + $0x4b0] sm:$0xff]
    %v1147 = vld [vmem:[#allocation4 + $0x4b8] sm:$0xff]
    %v1148 = vld [vmem:[#allocation4 + $0x4c0] sm:$0xff]
    %v1149 = vld [vmem:[#allocation4 + $0x4c8] sm:$0xff]
    %v1150 = vld [vmem:[#allocation4 + $0x4d0] sm:$0xff]
    %v1151 = vld [vmem:[#allocation4 + $0x4d8] sm:$0xff]
    %v1152 = vld [vmem:[#allocation4 + $0x4e0] sm:$0xff]
    %v1153 = vld [vmem:[#allocation4 + $0x4e8] sm:$0xff]
    %v1154 = vld [vmem:[#allocation4 + $0x4f0] sm:$0xff]
    %v1155 = vld [vmem:[#allocation4 + $0x4f8] sm:$0xff]
    %v1156 = vld [vmem:[#allocation4 + $0x500] sm:$0xff]
    %v1157 = vld [vmem:[#allocation4 + $0x508] sm:$0xff]
    %v1158 = vld [vmem:[#allocation4 + $0x510] sm:$0xff]
    %v1159 = vld [vmem:[#allocation4 + $0x518] sm:$0xff]
    %v1160 = vld [vmem:[#allocation4 + $0x520] sm:$0xff]
    %v1161 = vld [vmem:[#allocation4 + $0x528] sm:$0xff]
    %v1162 = vld [vmem:[#allocation4 + $0x530] sm:$0xff]
    %v1163 = vld [vmem:[#allocation4 + $0x538] sm:$0xff]
    %v1164 = vld [vmem:[#allocation4 + $0x540] sm:$0xff]
    %v1165 = vld [vmem:[#allocation4 + $0x548] sm:$0xff]
    %v1166 = vld [vmem:[#allocation4 + $0x550] sm:$0xff]
    %v1167 = vld [vmem:[#allocation4 + $0x558] sm:$0xff]
    %v1168 = vld [vmem:[#allocation4 + $0x560] sm:$0xff]
    %v1169 = vld [vmem:[#allocation4 + $0x568] sm:$0xff]
    %v1170 = vld [vmem:[#allocation4 + $0x570] sm:$0xff]
    %v1171 = vld [vmem:[#allocation4 + $0x578] sm:$0xff]
    %v1172 = vld [vmem:[#allocation4 + $0x580] sm:$0xff]
    %v1173 = vld [vmem:[#allocation4 + $0x588] sm:$0xff]
    %v1174 = vld [vmem:[#allocation4 + $0x590] sm:$0xff]
    %v1175 = vld [vmem:[#allocation4 + $0x598] sm:$0xff]
    %v1176 = vld [vmem:[#allocation4 + $0x5a0] sm:$0xff]
    %v1177 = vld [vmem:[#allocation4 + $0x5a8] sm:$0xff]
    %v1178 = vld [vmem:[#allocation4 + $0x5b0] sm:$0xff]
    %v1179 = vld [vmem:[#allocation4 + $0x5b8] sm:$0xff]
    %v1180 = vld [vmem:[#allocation4 + $0x5c0] sm:$0xff]
    %v1181 = vld [vmem:[#allocation4 + $0x5c8] sm:$0xff]
    %v1182 = vld [vmem:[#allocation4 + $0x5d0] sm:$0xff]
    %v1183 = vld [vmem:[#allocation4 + $0x5d8] sm:$0xff]
    %v1184 = vld [vmem:[#allocation4 + $0x5e0] sm:$0xff]
    %v1185 = vld [vmem:[#allocation4 + $0x5e8] sm:$0xff]
    %v1186 = vld [vmem:[#allocation4 + $0x5f0] sm:$0xff]
    %v1187 = vld [vmem:[#allocation4 + $0x5f8] sm:$0xff]
    %v1188 = vld [vmem:[#allocation4 + $0x600] sm:$0xff]
    %v1189 = vld [vmem:[#allocation4 + $0x608] sm:$0xff]
    %v1190 = vld [vmem:[#allocation4 + $0x610] sm:$0xff]
    %v1191 = vld [vmem:[#allocation4 + $0x618] sm:$0xff]
    %v1192 = vld [vmem:[#allocation4 + $0x620] sm:$0xff]
    %v1193 = vld [vmem:[#allocation4 + $0x628] sm:$0xff]
    %v1194 = vld [vmem:[#allocation4 + $0x630] sm:$0xff]
    %v1195 = vld [vmem:[#allocation4 + $0x638] sm:$0xff]
    %v1196 = vld [vmem:[#allocation4 + $0x640] sm:$0xff]
    %v1197 = vld [vmem:[#allocation4 + $0x648] sm:$0xff]
    %v1198 = vld [vmem:[#allocation4 + $0x650] sm:$0xff]
    %v1199 = vld [vmem:[#allocation4 + $0x658] sm:$0xff]
    %v1200 = vld [vmem:[#allocation4 + $0x660] sm:$0xff]
    %v1201 = vld [vmem:[#allocation4 + $0x668] sm:$0xff]
    %v1202 = vld [vmem:[#allocation4 + $0x670] sm:$0xff]
    %v1203 = vld [vmem:[#allocation4 + $0x678] sm:$0xff]
    %v1204 = vld [vmem:[#allocation4 + $0x680] sm:$0xff]
    %v1205 = vld [vmem:[#allocation4 + $0x688] sm:$0xff]
    %v1206 = vld [vmem:[#allocation4 + $0x690] sm:$0xff]
    %v1207 = vld [vmem:[#allocation4 + $0x698] sm:$0xff]
    %v1208 = vld [vmem:[#allocation4 + $0x6a0] sm:$0xff]
    %v1209 = vld [vmem:[#allocation4 + $0x6a8] sm:$0xff]
    %v1210 = vld [vmem:[#allocation4 + $0x6b0] sm:$0xff]
    %v1211 = vld [vmem:[#allocation4 + $0x6b8] sm:$0xff]
    %v1212 = vld [vmem:[#allocation4 + $0x6c0] sm:$0xff]
    %v1213 = vld [vmem:[#allocation4 + $0x6c8] sm:$0xff]
    %v1214 = vld [vmem:[#allocation4 + $0x6d0] sm:$0xff]
    %v1215 = vld [vmem:[#allocation4 + $0x6d8] sm:$0xff]
    %v1216 = vld [vmem:[#allocation4 + $0x6e0] sm:$0xff]
    %v1217 = vld [vmem:[#allocation4 + $0x6e8] sm:$0xff]
    %v1218 = vld [vmem:[#allocation4 + $0x6f0] sm:$0xff]
    %v1219 = vld [vmem:[#allocation4 + $0x6f8] sm:$0xff]
    %v1220 = vld [vmem:[#allocation4 + $0x700] sm:$0xff]
    %v1221 = vld [vmem:[#allocation4 + $0x708] sm:$0xff]
    %v1222 = vld [vmem:[#allocation4 + $0x710] sm:$0xff]
    %v1223 = vld [vmem:[#allocation4 + $0x718] sm:$0xff]
    %v1224 = vld [vmem:[#allocation4 + $0x720] sm:$0xff]
    %v1225 = vld [vmem:[#allocation4 + $0x728] sm:$0xff]
    %v1226 = vld [vmem:[#allocation4 + $0x730] sm:$0xff]
    %v1227 = vld [vmem:[#allocation4 + $0x738] sm:$0xff]
    %v1228 = vld [vmem:[#allocation4 + $0x740] sm:$0xff]
    %v1229 = vld [vmem:[#allocation4 + $0x748] sm:$0xff]
    %v1230 = vld [vmem:[#allocation4 + $0x750] sm:$0xff]
    %v1231 = vld [vmem:[#allocation4 + $0x758] sm:$0xff]
    %v1232 = vld [vmem:[#allocation4 + $0x760] sm:$0xff]
    %v1233 = vld [vmem:[#allocation4 + $0x768] sm:$0xff]
    %v1234 = vld [vmem:[#allocation4 + $0x770] sm:$0xff]
    %v1235 = vld [vmem:[#allocation4 + $0x778] sm:$0xff]
    %v1236 = vld [vmem:[#allocation4 + $0x780] sm:$0xff]
    %v1237 = vld [vmem:[#allocation4 + $0x788] sm:$0xff]
    %v1238 = vld [vmem:[#allocation4 + $0x790] sm:$0xff]
    %v1239 = vld [vmem:[#allocation4 + $0x798] sm:$0xff]
    %v1240 = vld [vmem:[#allocation4 + $0x7a0] sm:$0xff]
    %v1241 = vld [vmem:[#allocation4 + $0x7a8] sm:$0xff]
    %v1242 = vld [vmem:[#allocation4 + $0x7b0] sm:$0xff]
    %v1243 = vld [vmem:[#allocation4 + $0x7b8] sm:$0xff]
    %v1244 = vld [vmem:[#allocation4 + $0x7c0] sm:$0xff]
    %v1245 = vld [vmem:[#allocation4 + $0x7c8] sm:$0xff]
    %v1246 = vld [vmem:[#allocation4 + $0x7d0] sm:$0xff]
    %v1247 = vld [vmem:[#allocation4 + $0x7d8] sm:$0xff]
    %v1248 = vld [vmem:[#allocation4 + $0x7e0] sm:$0xff]
    %v1249 = vld [vmem:[#allocation4 + $0x7e8] sm:$0xff]
    %v1250 = vld [vmem:[#allocation4 + $0x7f0] sm:$0xff]
    %v1251 = vld [vmem:[#allocation4 + $0x7f8] sm:$0xff]
    %v1252 = vld [vmem:[#allocation4 + $0x800] sm:$0xff]
    %v1253 = vld [vmem:[#allocation4 + $0x808] sm:$0xff]
    %v1254 = vld [vmem:[#allocation4 + $0x810] sm:$0xff]
    %v1255 = vld [vmem:[#allocation4 + $0x818] sm:$0xff]
    %v1256 = vld [vmem:[#allocation4 + $0x820] sm:$0xff]
    %v1257 = vld [vmem:[#allocation4 + $0x828] sm:$0xff]
    %v1258 = vld [vmem:[#allocation4 + $0x830] sm:$0xff]
    %v1259 = vld [vmem:[#allocation4 + $0x838] sm:$0xff]
    %v1260 = vld [vmem:[#allocation4 + $0x840] sm:$0xff]
    %v1261 = vld [vmem:[#allocation4 + $0x848] sm:$0xff]
    %v1262 = vld [vmem:[#allocation4 + $0x850] sm:$0xff]
    %v1263 = vld [vmem:[#allocation4 + $0x858] sm:$0xff]
    %v1264 = vld [vmem:[#allocation4 + $0x860] sm:$0xff]
    %v1265 = vld [vmem:[#allocation4 + $0x868] sm:$0xff]
    %v1266 = vld [vmem:[#allocation4 + $0x870] sm:$0xff]
    %v1267 = vld [vmem:[#allocation4 + $0x878] sm:$0xff]
    %v1268 = vld [vmem:[#allocation4 + $0x880] sm:$0xff]
    %v1269 = vld [vmem:[#allocation4 + $0x888] sm:$0xff]
    %v1270 = vld [vmem:[#allocation4 + $0x890] sm:$0xff]
    %v1271 = vld [vmem:[#allocation4 + $0x898] sm:$0xff]
    %v1272 = vld [vmem:[#allocation4 + $0x8a0] sm:$0xff]
    %v1273 = vld [vmem:[#allocation4 + $0x8a8] sm:$0xff]
    %v1274 = vld [vmem:[#allocation4 + $0x8b0] sm:$0xff]
    %v1275 = vld [vmem:[#allocation4 + $0x8b8] sm:$0xff]
    %v1276 = vld [vmem:[#allocation4 + $0x8c0] sm:$0xff]
    %v1277 = vld [vmem:[#allocation4 + $0x8c8] sm:$0xff]
    %v1278 = vld [vmem:[#allocation4 + $0x8d0] sm:$0xff]
    %v1279 = vld [vmem:[#allocation4 + $0x8d8] sm:$0xff]
    %v1280 = vld [vmem:[#allocation4 + $0x8e0] sm:$0xff]
    %v1281 = vld [vmem:[#allocation4 + $0x8e8] sm:$0xff]
    %v1282 = vld [vmem:[#allocation4 + $0x8f0] sm:$0xff]
    %v1283 = vld [vmem:[#allocation4 + $0x8f8] sm:$0xff]
    %v1284 = vld [vmem:[#allocation4 + $0x900] sm:$0xff]
    %v1285 = vld [vmem:[#allocation4 + $0x908] sm:$0xff]
    %v1286 = vld [vmem:[#allocation4 + $0x910] sm:$0xff]
    %v1287 = vld [vmem:[#allocation4 + $0x918] sm:$0xff]
    %v1288 = vld [vmem:[#allocation4 + $0x920] sm:$0xff]
    %v1289 = vld [vmem:[#allocation4 + $0x928] sm:$0xff]
    %v1290 = vld [vmem:[#allocation4 + $0x930] sm:$0xff]
    %v1291 = vld [vmem:[#allocation4 + $0x938] sm:$0xff]
    %v1292 = vld [vmem:[#allocation4 + $0x940] sm:$0xff]
    %v1293 = vld [vmem:[#allocation4 + $0x948] sm:$0xff]
    %v1294 = vld [vmem:[#allocation4 + $0x950] sm:$0xff]
    %v1295 = vld [vmem:[#allocation4 + $0x958] sm:$0xff]
    %v1296 = vld [vmem:[#allocation4 + $0x960] sm:$0xff]
    %v1297 = vld [vmem:[#allocation4 + $0x968] sm:$0xff]
    %v1298 = vld [vmem:[#allocation4 + $0x970] sm:$0xff]
    %v1299 = vld [vmem:[#allocation4 + $0x978] sm:$0xff]
    %v1300 = vld [vmem:[#allocation4 + $0x980] sm:$0xff]
    %v1301 = vld [vmem:[#allocation4 + $0x988] sm:$0xff]
    %v1302 = vld [vmem:[#allocation4 + $0x990] sm:$0xff]
    %v1303 = vld [vmem:[#allocation4 + $0x998] sm:$0xff]
    %v1304 = vld [vmem:[#allocation4 + $0x9a0] sm:$0xff]
    %v1305 = vld [vmem:[#allocation4 + $0x9a8] sm:$0xff]
    %v1306 = vld [vmem:[#allocation4 + $0x9b0] sm:$0xff]
    %v1307 = vld [vmem:[#allocation4 + $0x9b8] sm:$0xff]
    %v1308 = vld [vmem:[#allocation4 + $0x9c0] sm:$0xff]
    %v1309 = vld [vmem:[#allocation4 + $0x9c8] sm:$0xff]
    %v1310 = vld [vmem:[#allocation4 + $0x9d0] sm:$0xff]
    %v1311 = vld [vmem:[#allocation4 + $0x9d8] sm:$0xff]
    %v1312 = vld [vmem:[#allocation4 + $0x9e0] sm:$0xff]
    %v1313 = vld [vmem:[#allocation4 + $0x9e8] sm:$0xff]
    %v1314 = vld [vmem:[#allocation4 + $0x9f0] sm:$0xff]
    %v1315 = vld [vmem:[#allocation4 + $0x9f8] sm:$0xff]
    %s1316 = scalar_lea.vmem [#allocation2], 3
    %v1317 = vld [vmem:[%s1316] ss:$8 sm:$0xf]
    %v1319 = vlaneseq
    %v1320 = vshrl.u32 %v1319, 7
    %v1321 = vsub.s32 0, %v1320
    %v1322 = vrot.slane %v1317, %v1321
    %v1323 = vlaneseq
    %v1324 = vshrl.u32 %v1323, 7
    %v1325 = vsub.s32 1, %v1324
    %v1326 = vrot.slane %v1317, %v1325
    %v1327 = vlaneseq
    %v1328 = vshrl.u32 %v1327, 7
    %v1329 = vsub.s32 2, %v1328
    %v1330 = vrot.slane %v1317, %v1329
    %v1331 = vlaneseq
    %v1332 = vshrl.u32 %v1331, 7
    %v1333 = vsub.s32 3, %v1332
    %v1334 = vrot.slane %v1317, %v1333
    %1339 = vmatprep.subr.bf16.mxu0 %v1061
    %1340 = vmatpush1.bf16.msra.mxu0 %v1060
    %1341 = vmatprep.subr.bf16.mxu0 %v1065
    %1342 = vmatpush1.bf16.msra.mxu0 %v1064
    %1343 = vmatprep.subr.bf16.mxu0 %v1069
    %1344 = vmatpush1.bf16.msra.mxu0 %v1068
    %1345 = vmatprep.subr.bf16.mxu0 %v1073
    %1346 = vmatpush1.bf16.msra.mxu0 %v1072
    %1347 = vmatprep.subr.bf16.mxu0 %v1077
    %1348 = vmatpush1.bf16.msra.mxu0 %v1076
    %1349 = vmatprep.subr.bf16.mxu0 %v1081
    %1350 = vmatpush1.bf16.msra.mxu0 %v1080
    %1351 = vmatprep.subr.bf16.mxu0 %v1085
    %1352 = vmatpush1.bf16.msra.mxu0 %v1084
    %1353 = vmatprep.subr.bf16.mxu0 %v1089
    %1354 = vmatpush1.bf16.msra.mxu0 %v1088
    %1355 = vmatprep.subr.bf16.mxu0 %v1093
    %1356 = vmatpush1.bf16.msra.mxu0 %v1092
    %1357 = vmatprep.subr.bf16.mxu0 %v1097
    %1358 = vmatpush1.bf16.msra.mxu0 %v1096
    %1359 = vmatprep.subr.bf16.mxu0 %v1101
    %1360 = vmatpush1.bf16.msra.mxu0 %v1100
    %1361 = vmatprep.subr.bf16.mxu0 %v1105
    %1362 = vmatpush1.bf16.msra.mxu0 %v1104
    %1363 = vmatprep.subr.bf16.mxu0 %v1109
    %1364 = vmatpush1.bf16.msra.mxu0 %v1108
    %1365 = vmatprep.subr.bf16.mxu0 %v1113
    %1366 = vmatpush1.bf16.msra.mxu0 %v1112
    %1367 = vmatprep.subr.bf16.mxu0 %v1117
    %1368 = vmatpush1.bf16.msra.mxu0 %v1116
    %1369 = vmatprep.subr.bf16.mxu0 %v1121
    %1370 = vmatpush1.bf16.msra.mxu0 %v1120
    %1371 = vmatprep.mubr.bf16.mxu0 %v1053
    %1372 = vmatmul.mubr.bf16.gmra.mrb[0].mxu0 %v1052
    %v1373 = vpop.f32.mrb[0].mxu0
    %v1374 = vadd.f32 %v1322, %v1373
    %v1375 = vpop.f32.mrb[0].mxu0
    %v1376 = vadd.f32 %v1326, %v1375
    %v1377 = vpop.f32.mrb[0].mxu0
    %v1378 = vpop.f32.mrb[0].mxu0
    %1379 = vdwg.mxu0
    %1380 = vmatprep.subr.bf16.mxu0 %v1125
    %1381 = vmatpush1.bf16.msra.mxu0 %v1124
    %1382 = vmatprep.subr.bf16.mxu0 %v1129
    %1383 = vmatpush1.bf16.msra.mxu0 %v1128
    %1384 = vmatprep.subr.bf16.mxu0 %v1133
    %1385 = vmatpush1.bf16.msra.mxu0 %v1132
    %1386 = vmatprep.subr.bf16.mxu0 %v1137
    %1387 = vmatpush1.bf16.msra.mxu0 %v1136
    %1388 = vmatprep.subr.bf16.mxu0 %v1141
    %1389 = vmatpush1.bf16.msra.mxu0 %v1140
    %1390 = vmatprep.subr.bf16.mxu0 %v1145
    %1391 = vmatpush1.bf16.msra.mxu0 %v1144
    %1392 = vmatprep.subr.bf16.mxu0 %v1149
    %1393 = vmatpush1.bf16.msra.mxu0 %v1148
    %1394 = vmatprep.subr.bf16.mxu0 %v1153
    %1395 = vmatpush1.bf16.msra.mxu0 %v1152
    %1396 = vmatprep.subr.bf16.mxu0 %v1157
    %1397 = vmatpush1.bf16.msra.mxu0 %v1156
    %1398 = vmatprep.subr.bf16.mxu0 %v1161
    %1399 = vmatpush1.bf16.msra.mxu0 %v1160
    %1400 = vmatprep.subr.bf16.mxu0 %v1165
    %1401 = vmatpush1.bf16.msra.mxu0 %v1164
    %1402 = vmatprep.subr.bf16.mxu0 %v1169
    %1403 = vmatpush1.bf16.msra.mxu0 %v1168
    %1404 = vmatprep.subr.bf16.mxu0 %v1173
    %1405 = vmatpush1.bf16.msra.mxu0 %v1172
    %1406 = vmatprep.subr.bf16.mxu0 %v1177
    %1407 = vmatpush1.bf16.msra.mxu0 %v1176
    %1408 = vmatprep.subr.bf16.mxu0 %v1181
    %1409 = vmatpush1.bf16.msra.mxu0 %v1180
    %1410 = vmatprep.subr.bf16.mxu0 %v1185
    %1411 = vmatpush1.bf16.msra.mxu0 %v1184
    %1412 = vmatprep.mubr.bf16.mxu0 %v1055
    %1413 = vmatmul.mubr.bf16.gmra.mrb[0].mxu0 %v1054
    %v1414 = vpop.f32.mrb[0].mxu0
    %v1415 = vadd.f32 %v1374, %v1414
    %v1416 = vpop.f32.mrb[0].mxu0
    %v1417 = vadd.f32 %v1376, %v1416
    %v1418 = vpop.f32.mrb[0].mxu0
    %v1419 = vpop.f32.mrb[0].mxu0
    %1420 = vdwg.mxu0
    %1421 = vmatprep.subr.bf16.mxu0 %v1189
    %1422 = vmatpush1.bf16.msra.mxu0 %v1188
    %1423 = vmatprep.subr.bf16.mxu0 %v1193
    %1424 = vmatpush1.bf16.msra.mxu0 %v1192
    %1425 = vmatprep.subr.bf16.mxu0 %v1197
    %1426 = vmatpush1.bf16.msra.mxu0 %v1196
    %1427 = vmatprep.subr.bf16.mxu0 %v1201
    %1428 = vmatpush1.bf16.msra.mxu0 %v1200
    %1429 = vmatprep.subr.bf16.mxu0 %v1205
    %1430 = vmatpush1.bf16.msra.mxu0 %v1204
    %1431 = vmatprep.subr.bf16.mxu0 %v1209
    %1432 = vmatpush1.bf16.msra.mxu0 %v1208
    %1433 = vmatprep.subr.bf16.mxu0 %v1213
    %1434 = vmatpush1.bf16.msra.mxu0 %v1212
    %1435 = vmatprep.subr.bf16.mxu0 %v1217
    %1436 = vmatpush1.bf16.msra.mxu0 %v1216
    %1437 = vmatprep.subr.bf16.mxu0 %v1221
    %1438 = vmatpush1.bf16.msra.mxu0 %v1220
    %1439 = vmatprep.subr.bf16.mxu0 %v1225
    %1440 = vmatpush1.bf16.msra.mxu0 %v1224
    %1441 = vmatprep.subr.bf16.mxu0 %v1229
    %1442 = vmatpush1.bf16.msra.mxu0 %v1228
    %1443 = vmatprep.subr.bf16.mxu0 %v1233
    %1444 = vmatpush1.bf16.msra.mxu0 %v1232
    %1445 = vmatprep.subr.bf16.mxu0 %v1237
    %1446 = vmatpush1.bf16.msra.mxu0 %v1236
    %1447 = vmatprep.subr.bf16.mxu0 %v1241
    %1448 = vmatpush1.bf16.msra.mxu0 %v1240
    %1449 = vmatprep.subr.bf16.mxu0 %v1245
    %1450 = vmatpush1.bf16.msra.mxu0 %v1244
    %1451 = vmatprep.subr.bf16.mxu0 %v1249
    %1452 = vmatpush1.bf16.msra.mxu0 %v1248
    %1453 = vmatprep.mubr.bf16.mxu0 %v1057
    %1454 = vmatmul.mubr.bf16.gmra.mrb[0].mxu0 %v1056
    %v1455 = vpop.f32.mrb[0].mxu0
    %v1456 = vadd.f32 %v1415, %v1455
    %v1457 = vpop.f32.mrb[0].mxu0
    %v1458 = vadd.f32 %v1417, %v1457
    %v1459 = vpop.f32.mrb[0].mxu0
    %v1460 = vpop.f32.mrb[0].mxu0
    %1461 = vdwg.mxu0
    %1462 = vmatprep.subr.bf16.mxu0 %v1253
    %1463 = vmatpush1.bf16.msra.mxu0 %v1252
    %1464 = vmatprep.subr.bf16.mxu0 %v1257
    %1465 = vmatpush1.bf16.msra.mxu0 %v1256
    %1466 = vmatprep.subr.bf16.mxu0 %v1261
    %1467 = vmatpush1.bf16.msra.mxu0 %v1260
    %1468 = vmatprep.subr.bf16.mxu0 %v1265
    %1469 = vmatpush1.bf16.msra.mxu0 %v1264
    %1470 = vmatprep.subr.bf16.mxu0 %v1269
    %1471 = vmatpush1.bf16.msra.mxu0 %v1268
    %1472 = vmatprep.subr.bf16.mxu0 %v1273
    %1473 = vmatpush1.bf16.msra.mxu0 %v1272
    %1474 = vmatprep.subr.bf16.mxu0 %v1277
    %1475 = vmatpush1.bf16.msra.mxu0 %v1276
    %1476 = vmatprep.subr.bf16.mxu0 %v1281
    %1477 = vmatpush1.bf16.msra.mxu0 %v1280
    %1478 = vmatprep.subr.bf16.mxu0 %v1285
    %1479 = vmatpush1.bf16.msra.mxu0 %v1284
    %1480 = vmatprep.subr.bf16.mxu0 %v1289
    %1481 = vmatpush1.bf16.msra.mxu0 %v1288
    %1482 = vmatprep.subr.bf16.mxu0 %v1293
    %1483 = vmatpush1.bf16.msra.mxu0 %v1292
    %1484 = vmatprep.subr.bf16.mxu0 %v1297
    %1485 = vmatpush1.bf16.msra.mxu0 %v1296
    %1486 = vmatprep.subr.bf16.mxu0 %v1301
    %1487 = vmatpush1.bf16.msra.mxu0 %v1300
    %1488 = vmatprep.subr.bf16.mxu0 %v1305
    %1489 = vmatpush1.bf16.msra.mxu0 %v1304
    %1490 = vmatprep.subr.bf16.mxu0 %v1309
    %1491 = vmatpush1.bf16.msra.mxu0 %v1308
    %1492 = vmatprep.subr.bf16.mxu0 %v1313
    %1493 = vmatpush1.bf16.msra.mxu0 %v1312
    %1494 = vmatprep.mubr.bf16.mxu0 %v1059
    %1495 = vmatmul.mubr.bf16.gmra.mrb[0].mxu0 %v1058
    %v1496 = vpop.f32.mrb[0].mxu0
    %v1497 = vadd.f32 %v1456, %v1496
    %v1498 = vpop.f32.mrb[0].mxu0
    %v1499 = vadd.f32 %v1458, %v1498
    %v1500 = vpop.f32.mrb[0].mxu0
    %v1501 = vpop.f32.mrb[0].mxu0
    %1502 = vdwg.mxu0
    %1503 = vmatprep.subr.bf16.mxu0 %v1063
    %1504 = vmatpush1.bf16.msra.mxu0 %v1062
    %1505 = vmatprep.subr.bf16.mxu0 %v1067
    %1506 = vmatpush1.bf16.msra.mxu0 %v1066
    %1507 = vmatprep.subr.bf16.mxu0 %v1071
    %1508 = vmatpush1.bf16.msra.mxu0 %v1070
    %1509 = vmatprep.subr.bf16.mxu0 %v1075
    %1510 = vmatpush1.bf16.msra.mxu0 %v1074
    %1511 = vmatprep.subr.bf16.mxu0 %v1079
    %1512 = vmatpush1.bf16.msra.mxu0 %v1078
    %1513 = vmatprep.subr.bf16.mxu0 %v1083
    %1514 = vmatpush1.bf16.msra.mxu0 %v1082
    %1515 = vmatprep.subr.bf16.mxu0 %v1087
    %1516 = vmatpush1.bf16.msra.mxu0 %v1086
    %1517 = vmatprep.subr.bf16.mxu0 %v1091
    %1518 = vmatpush1.bf16.msra.mxu0 %v1090
    %1519 = vmatprep.subr.bf16.mxu0 %v1095
    %1520 = vmatpush1.bf16.msra.mxu0 %v1094
    %1521 = vmatprep.subr.bf16.mxu0 %v1099
    %1522 = vmatpush1.bf16.msra.mxu0 %v1098
    %1523 = vmatprep.subr.bf16.mxu0 %v1103
    %1524 = vmatpush1.bf16.msra.mxu0 %v1102
    %1525 = vmatprep.subr.bf16.mxu0 %v1107
    %1526 = vmatpush1.bf16.msra.mxu0 %v1106
    %1527 = vmatprep.subr.bf16.mxu0 %v1111
    %1528 = vmatpush1.bf16.msra.mxu0 %v1110
    %1529 = vmatprep.subr.bf16.mxu0 %v1115
    %1530 = vmatpush1.bf16.msra.mxu0 %v1114
    %1531 = vmatprep.subr.bf16.mxu0 %v1119
    %1532 = vmatpush1.bf16.msra.mxu0 %v1118
    %1533 = vmatprep.subr.bf16.mxu0 %v1123
    %1534 = vmatpush1.bf16.msra.mxu0 %v1122
    %1535 = vmatprep.mubr.bf16.mxu0 %v1053
    %1536 = vmatmul.mubr.bf16.gmra.mrb[0].mxu0 %v1052
    %v1537 = vpop.f32.mrb[0].mxu0
    %v1538 = vadd.f32 %v1330, %v1537
    %v1539 = vpop.f32.mrb[0].mxu0
    %v1540 = vadd.f32 %v1334, %v1539
    %v1541 = vpop.f32.mrb[0].mxu0
    %v1542 = vpop.f32.mrb[0].mxu0
    %1543 = vdwg.mxu0
    %1544 = vmatprep.subr.bf16.mxu0 %v1127
    %1545 = vmatpush1.bf16.msra.mxu0 %v1126
    %1546 = vmatprep.subr.bf16.mxu0 %v1131
    %1547 = vmatpush1.bf16.msra.mxu0 %v1130
    %1548 = vmatprep.subr.bf16.mxu0 %v1135
    %1549 = vmatpush1.bf16.msra.mxu0 %v1134
    %1550 = vmatprep.subr.bf16.mxu0 %v1139
    %1551 = vmatpush1.bf16.msra.mxu0 %v1138
    %1552 = vmatprep.subr.bf16.mxu0 %v1143
    %1553 = vmatpush1.bf16.msra.mxu0 %v1142
    %1554 = vmatprep.subr.bf16.mxu0 %v1147
    %1555 = vmatpush1.bf16.msra.mxu0 %v1146
    %1556 = vmatprep.subr.bf16.mxu0 %v1151
    %1557 = vmatpush1.bf16.msra.mxu0 %v1150
    %1558 = vmatprep.subr.bf16.mxu0 %v1155
    %1559 = vmatpush1.bf16.msra.mxu0 %v1154
    %1560 = vmatprep.subr.bf16.mxu0 %v1159
    %1561 = vmatpush1.bf16.msra.mxu0 %v1158
    %1562 = vmatprep.subr.bf16.mxu0 %v1163
    %1563 = vmatpush1.bf16.msra.mxu0 %v1162
    %1564 = vmatprep.subr.bf16.mxu0 %v1167
    %1565 = vmatpush1.bf16.msra.mxu0 %v1166
    %1566 = vmatprep.subr.bf16.mxu0 %v1171
    %1567 = vmatpush1.bf16.msra.mxu0 %v1170
    %1568 = vmatprep.subr.bf16.mxu0 %v1175
    %1569 = vmatpush1.bf16.msra.mxu0 %v1174
    %1570 = vmatprep.subr.bf16.mxu0 %v1179
    %1571 = vmatpush1.bf16.msra.mxu0 %v1178
    %1572 = vmatprep.subr.bf16.mxu0 %v1183
    %1573 = vmatpush1.bf16.msra.mxu0 %v1182
    %1574 = vmatprep.subr.bf16.mxu0 %v1187
    %1575 = vmatpush1.bf16.msra.mxu0 %v1186
    %1576 = vmatprep.mubr.bf16.mxu0 %v1055
    %1577 = vmatmul.mubr.bf16.gmra.mrb[0].mxu0 %v1054
    %v1578 = vpop.f32.mrb[0].mxu0
    %v1579 = vadd.f32 %v1538, %v1578
    %v1580 = vpop.f32.mrb[0].mxu0
    %v1581 = vadd.f32 %v1540, %v1580
    %v1582 = vpop.f32.mrb[0].mxu0
    %v1583 = vpop.f32.mrb[0].mxu0
    %1584 = vdwg.mxu0
    %1585 = vmatprep.subr.bf16.mxu0 %v1191
    %1586 = vmatpush1.bf16.msra.mxu0 %v1190
    %1587 = vmatprep.subr.bf16.mxu0 %v1195
    %1588 = vmatpush1.bf16.msra.mxu0 %v1194
    %1589 = vmatprep.subr.bf16.mxu0 %v1199
    %1590 = vmatpush1.bf16.msra.mxu0 %v1198
    %1591 = vmatprep.subr.bf16.mxu0 %v1203
    %1592 = vmatpush1.bf16.msra.mxu0 %v1202
    %1593 = vmatprep.subr.bf16.mxu0 %v1207
    %1594 = vmatpush1.bf16.msra.mxu0 %v1206
    %1595 = vmatprep.subr.bf16.mxu0 %v1211
    %1596 = vmatpush1.bf16.msra.mxu0 %v1210
    %1597 = vmatprep.subr.bf16.mxu0 %v1215
    %1598 = vmatpush1.bf16.msra.mxu0 %v1214
    %1599 = vmatprep.subr.bf16.mxu0 %v1219
    %1600 = vmatpush1.bf16.msra.mxu0 %v1218
    %1601 = vmatprep.subr.bf16.mxu0 %v1223
    %1602 = vmatpush1.bf16.msra.mxu0 %v1222
    %1603 = vmatprep.subr.bf16.mxu0 %v1227
    %1604 = vmatpush1.bf16.msra.mxu0 %v1226
    %1605 = vmatprep.subr.bf16.mxu0 %v1231
    %1606 = vmatpush1.bf16.msra.mxu0 %v1230
    %1607 = vmatprep.subr.bf16.mxu0 %v1235
    %1608 = vmatpush1.bf16.msra.mxu0 %v1234
    %1609 = vmatprep.subr.bf16.mxu0 %v1239
    %1610 = vmatpush1.bf16.msra.mxu0 %v1238
    %1611 = vmatprep.subr.bf16.mxu0 %v1243
    %1612 = vmatpush1.bf16.msra.mxu0 %v1242
    %1613 = vmatprep.subr.bf16.mxu0 %v1247
    %1614 = vmatpush1.bf16.msra.mxu0 %v1246
    %1615 = vmatprep.subr.bf16.mxu0 %v1251
    %1616 = vmatpush1.bf16.msra.mxu0 %v1250
    %1617 = vmatprep.mubr.bf16.mxu0 %v1057
    %1618 = vmatmul.mubr.bf16.gmra.mrb[0].mxu0 %v1056
    %v1619 = vpop.f32.mrb[0].mxu0
    %v1620 = vadd.f32 %v1579, %v1619
    %v1621 = vpop.f32.mrb[0].mxu0
    %v1622 = vadd.f32 %v1581, %v1621
    %v1623 = vpop.f32.mrb[0].mxu0
    %v1624 = vpop.f32.mrb[0].mxu0
    %1625 = vdwg.mxu0
    %1626 = vmatprep.subr.bf16.mxu0 %v1255
    %1627 = vmatpush1.bf16.msra.mxu0 %v1254
    %1628 = vmatprep.subr.bf16.mxu0 %v1259
    %1629 = vmatpush1.bf16.msra.mxu0 %v1258
    %1630 = vmatprep.subr.bf16.mxu0 %v1263
    %1631 = vmatpush1.bf16.msra.mxu0 %v1262
    %1632 = vmatprep.subr.bf16.mxu0 %v1267
    %1633 = vmatpush1.bf16.msra.mxu0 %v1266
    %1634 = vmatprep.subr.bf16.mxu0 %v1271
    %1635 = vmatpush1.bf16.msra.mxu0 %v1270
    %1636 = vmatprep.subr.bf16.mxu0 %v1275
    %1637 = vmatpush1.bf16.msra.mxu0 %v1274
    %1638 = vmatprep.subr.bf16.mxu0 %v1279
    %1639 = vmatpush1.bf16.msra.mxu0 %v1278
    %1640 = vmatprep.subr.bf16.mxu0 %v1283
    %1641 = vmatpush1.bf16.msra.mxu0 %v1282
    %1642 = vmatprep.subr.bf16.mxu0 %v1287
    %1643 = vmatpush1.bf16.msra.mxu0 %v1286
    %1644 = vmatprep.subr.bf16.mxu0 %v1291
    %1645 = vmatpush1.bf16.msra.mxu0 %v1290
    %1646 = vmatprep.subr.bf16.mxu0 %v1295
    %1647 = vmatpush1.bf16.msra.mxu0 %v1294
    %1648 = vmatprep.subr.bf16.mxu0 %v1299
    %1649 = vmatpush1.bf16.msra.mxu0 %v1298
    %1650 = vmatprep.subr.bf16.mxu0 %v1303
    %1651 = vmatpush1.bf16.msra.mxu0 %v1302
    %1652 = vmatprep.subr.bf16.mxu0 %v1307
    %1653 = vmatpush1.bf16.msra.mxu0 %v1306
    %1654 = vmatprep.subr.bf16.mxu0 %v1311
    %1655 = vmatpush1.bf16.msra.mxu0 %v1310
    %1656 = vmatprep.subr.bf16.mxu0 %v1315
    %1657 = vmatpush1.bf16.msra.mxu0 %v1314
    %1658 = vmatprep.mubr.bf16.mxu0 %v1059
    %1659 = vmatmul.mubr.bf16.gmra.mrb[0].mxu0 %v1058
    %v1660 = vpop.f32.mrb[0].mxu0
    %v1661 = vadd.f32 %v1620, %v1660
    %v1662 = vpop.f32.mrb[0].mxu0
    %v1663 = vadd.f32 %v1622, %v1662
    %v1664 = vpop.f32.mrb[0].mxu0
    %v1665 = vpop.f32.mrb[0].mxu0
    %1666 = vdwg.mxu0
    %v1667 = vmax.f32 %v1497, 0.0
    %v1668 = vmax.f32 %v1499, 0.0
    %v1669 = vmax.f32 %v1661, 0.0
    %v1670 = vmax.f32 %v1663, 0.0
    %v1671 = vpack.c.bf16 %v1667, %v1667
    %v1672 = vpack.c.bf16 %v1668, %v1668
    %v1673 = vpack.c.bf16 %v1669, %v1669
    %v1674 = vpack.c.bf16 %v1670, %v1670
    %v1675 = vld [vmem:[#allocation3] sm:$0xff]
    %v1676 = vld [vmem:[#allocation3 + $0x8] sm:$0xff]
    %v1677 = vld [vmem:[#allocation3 + $0x10] sm:$0xff]
    %v1678 = vld [vmem:[#allocation3 + $0x18] sm:$0xff]
    %v1679 = vld [vmem:[#allocation3 + $0x20] sm:$0xff]
    %v1680 = vld [vmem:[#allocation3 + $0x28] sm:$0xff]
    %v1681 = vld [vmem:[#allocation3 + $0x30] sm:$0xff]
    %v1682 = vld [vmem:[#allocation3 + $0x38] sm:$0xff]
    %v1683 = vld [vmem:[#allocation3 + $0x40] sm:$0xff]
    %v1684 = vld [vmem:[#allocation3 + $0x48] sm:$0xff]
    %v1685 = vld [vmem:[#allocation3 + $0x50] sm:$0xff]
    %v1686 = vld [vmem:[#allocation3 + $0x58] sm:$0xff]
    %v1687 = vld [vmem:[#allocation3 + $0x60] sm:$0xff]
    %v1688 = vld [vmem:[#allocation3 + $0x68] sm:$0xff]
    %v1689 = vld [vmem:[#allocation3 + $0x70] sm:$0xff]
    %v1690 = vld [vmem:[#allocation3 + $0x78] sm:$0xff]
    %v1691 = vld [vmem:[#allocation3 + $0x80] sm:$0xff]
    %v1692 = vld [vmem:[#allocation3 + $0x88] sm:$0xff]
    %v1693 = vld [vmem:[#allocation3 + $0x90] sm:$0xff]
    %v1694 = vld [vmem:[#allocation3 + $0x98] sm:$0xff]
    %v1695 = vld [vmem:[#allocation3 + $0xa0] sm:$0xff]
    %v1696 = vld [vmem:[#allocation3 + $0xa8] sm:$0xff]
    %v1697 = vld [vmem:[#allocation3 + $0xb0] sm:$0xff]
    %v1698 = vld [vmem:[#allocation3 + $0xb8] sm:$0xff]
    %v1699 = vld [vmem:[#allocation3 + $0xc0] sm:$0xff]
    %v1700 = vld [vmem:[#allocation3 + $0xc8] sm:$0xff]
    %v1701 = vld [vmem:[#allocation3 + $0xd0] sm:$0xff]
    %v1702 = vld [vmem:[#allocation3 + $0xd8] sm:$0xff]
    %v1703 = vld [vmem:[#allocation3 + $0xe0] sm:$0xff]
    %v1704 = vld [vmem:[#allocation3 + $0xe8] sm:$0xff]
    %v1705 = vld [vmem:[#allocation3 + $0xf0] sm:$0xff]
    %v1706 = vld [vmem:[#allocation3 + $0xf8] sm:$0xff]
    %v1707 = vld [vmem:[#allocation3 + $0x100] sm:$0xff]
    %v1708 = vld [vmem:[#allocation3 + $0x108] sm:$0xff]
    %v1709 = vld [vmem:[#allocation3 + $0x110] sm:$0xff]
    %v1710 = vld [vmem:[#allocation3 + $0x118] sm:$0xff]
    %v1711 = vld [vmem:[#allocation3 + $0x120] sm:$0xff]
    %v1712 = vld [vmem:[#allocation3 + $0x128] sm:$0xff]
    %v1713 = vld [vmem:[#allocation3 + $0x130] sm:$0xff]
    %v1714 = vld [vmem:[#allocation3 + $0x138] sm:$0xff]
    %v1715 = vld [vmem:[#allocation3 + $0x140] sm:$0xff]
    %v1716 = vld [vmem:[#allocation3 + $0x148] sm:$0xff]
    %v1717 = vld [vmem:[#allocation3 + $0x150] sm:$0xff]
    %v1718 = vld [vmem:[#allocation3 + $0x158] sm:$0xff]
    %v1719 = vld [vmem:[#allocation3 + $0x160] sm:$0xff]
    %v1720 = vld [vmem:[#allocation3 + $0x168] sm:$0xff]
    %v1721 = vld [vmem:[#allocation3 + $0x170] sm:$0xff]
    %v1722 = vld [vmem:[#allocation3 + $0x178] sm:$0xff]
    %v1723 = vld [vmem:[#allocation3 + $0x180] sm:$0xff]
    %v1724 = vld [vmem:[#allocation3 + $0x188] sm:$0xff]
    %v1725 = vld [vmem:[#allocation3 + $0x190] sm:$0xff]
    %v1726 = vld [vmem:[#allocation3 + $0x198] sm:$0xff]
    %v1727 = vld [vmem:[#allocation3 + $0x1a0] sm:$0xff]
    %v1728 = vld [vmem:[#allocation3 + $0x1a8] sm:$0xff]
    %v1729 = vld [vmem:[#allocation3 + $0x1b0] sm:$0xff]
    %v1730 = vld [vmem:[#allocation3 + $0x1b8] sm:$0xff]
    %v1731 = vld [vmem:[#allocation3 + $0x1c0] sm:$0xff]
    %v1732 = vld [vmem:[#allocation3 + $0x1c8] sm:$0xff]
    %v1733 = vld [vmem:[#allocation3 + $0x1d0] sm:$0xff]
    %v1734 = vld [vmem:[#allocation3 + $0x1d8] sm:$0xff]
    %v1735 = vld [vmem:[#allocation3 + $0x1e0] sm:$0xff]
    %v1736 = vld [vmem:[#allocation3 + $0x1e8] sm:$0xff]
    %v1737 = vld [vmem:[#allocation3 + $0x1f0] sm:$0xff]
    %v1738 = vld [vmem:[#allocation3 + $0x1f8] sm:$0xff]
    %s1739 = scalar_lea.vmem [#allocation2], 4
    %v1740 = vld [vmem:[%s1739] ss:$8 sm:$0x3]
    %v1742 = vlaneseq
    %v1743 = vshrl.u32 %v1742, 7
    %v1744 = vsub.s32 0, %v1743
    %v1745 = vrot.slane %v1740, %v1744
    %v1746 = vlaneseq
    %v1747 = vshrl.u32 %v1746, 7
    %v1748 = vsub.s32 1, %v1747
    %v1749 = vrot.slane %v1740, %v1748
    %1752 = vmatprep.subr.bf16.mxu0 %v1676
    %1753 = vmatpush1.bf16.msra.mxu0 %v1675
    %1754 = vmatprep.subr.bf16.mxu0 %v1678
    %1755 = vmatpush1.bf16.msra.mxu0 %v1677
    %1756 = vmatprep.subr.bf16.mxu0 %v1680
    %1757 = vmatpush1.bf16.msra.mxu0 %v1679
    %1758 = vmatprep.subr.bf16.mxu0 %v1682
    %1759 = vmatpush1.bf16.msra.mxu0 %v1681
    %1760 = vmatprep.subr.bf16.mxu0 %v1684
    %1761 = vmatpush1.bf16.msra.mxu0 %v1683
    %1762 = vmatprep.subr.bf16.mxu0 %v1686
    %1763 = vmatpush1.bf16.msra.mxu0 %v1685
    %1764 = vmatprep.subr.bf16.mxu0 %v1688
    %1765 = vmatpush1.bf16.msra.mxu0 %v1687
    %1766 = vmatprep.subr.bf16.mxu0 %v1690
    %1767 = vmatpush1.bf16.msra.mxu0 %v1689
    %1768 = vmatprep.subr.bf16.mxu0 %v1692
    %1769 = vmatpush1.bf16.msra.mxu0 %v1691
    %1770 = vmatprep.subr.bf16.mxu0 %v1694
    %1771 = vmatpush1.bf16.msra.mxu0 %v1693
    %1772 = vmatprep.subr.bf16.mxu0 %v1696
    %1773 = vmatpush1.bf16.msra.mxu0 %v1695
    %1774 = vmatprep.subr.bf16.mxu0 %v1698
    %1775 = vmatpush1.bf16.msra.mxu0 %v1697
    %1776 = vmatprep.subr.bf16.mxu0 %v1700
    %1777 = vmatpush1.bf16.msra.mxu0 %v1699
    %1778 = vmatprep.subr.bf16.mxu0 %v1702
    %1779 = vmatpush1.bf16.msra.mxu0 %v1701
    %1780 = vmatprep.subr.bf16.mxu0 %v1704
    %1781 = vmatpush1.bf16.msra.mxu0 %v1703
    %1782 = vmatprep.subr.bf16.mxu0 %v1706
    %1783 = vmatpush1.bf16.msra.mxu0 %v1705
    %1784 = vmatprep.mubr.bf16.mxu0 %v1672
    %1785 = vmatmul.mubr.bf16.gmra.mrb[0].mxu0 %v1671
    %v1786 = vpop.f32.mrb[0].mxu0
    %v1787 = vadd.f32 %v1745, %v1786
    %v1788 = vpop.f32.mrb[0].mxu0
    %v1789 = vadd.f32 %v1749, %v1788
    %v1790 = vpop.f32.mrb[0].mxu0
    %v1791 = vpop.f32.mrb[0].mxu0
    %1792 = vdwg.mxu0
    %1793 = vmatprep.subr.bf16.mxu0 %v1708
    %1794 = vmatpush1.bf16.msra.mxu0 %v1707
    %1795 = vmatprep.subr.bf16.mxu0 %v1710
    %1796 = vmatpush1.bf16.msra.mxu0 %v1709
    %1797 = vmatprep.subr.bf16.mxu0 %v1712
    %1798 = vmatpush1.bf16.msra.mxu0 %v1711
    %1799 = vmatprep.subr.bf16.mxu0 %v1714
    %1800 = vmatpush1.bf16.msra.mxu0 %v1713
    %1801 = vmatprep.subr.bf16.mxu0 %v1716
    %1802 = vmatpush1.bf16.msra.mxu0 %v1715
    %1803 = vmatprep.subr.bf16.mxu0 %v1718
    %1804 = vmatpush1.bf16.msra.mxu0 %v1717
    %1805 = vmatprep.subr.bf16.mxu0 %v1720
    %1806 = vmatpush1.bf16.msra.mxu0 %v1719
    %1807 = vmatprep.subr.bf16.mxu0 %v1722
    %1808 = vmatpush1.bf16.msra.mxu0 %v1721
    %1809 = vmatprep.subr.bf16.mxu0 %v1724
    %1810 = vmatpush1.bf16.msra.mxu0 %v1723
    %1811 = vmatprep.subr.bf16.mxu0 %v1726
    %1812 = vmatpush1.bf16.msra.mxu0 %v1725
    %1813 = vmatprep.subr.bf16.mxu0 %v1728
    %1814 = vmatpush1.bf16.msra.mxu0 %v1727
    %1815 = vmatprep.subr.bf16.mxu0 %v1730
    %1816 = vmatpush1.bf16.msra.mxu0 %v1729
    %1817 = vmatprep.subr.bf16.mxu0 %v1732
    %1818 = vmatpush1.bf16.msra.mxu0 %v1731
    %1819 = vmatprep.subr.bf16.mxu0 %v1734
    %1820 = vmatpush1.bf16.msra.mxu0 %v1733
    %1821 = vmatprep.subr.bf16.mxu0 %v1736
    %1822 = vmatpush1.bf16.msra.mxu0 %v1735
    %1823 = vmatprep.subr.bf16.mxu0 %v1738
    %1824 = vmatpush1.bf16.msra.mxu0 %v1737
    %1825 = vmatprep.mubr.bf16.mxu0 %v1674
    %1826 = vmatmul.mubr.bf16.gmra.mrb[0].mxu0 %v1673
    %v1827 = vpop.f32.mrb[0].mxu0
    %v1828 = vadd.f32 %v1787, %v1827
    %v1829 = vpop.f32.mrb[0].mxu0
    %v1830 = vadd.f32 %v1789, %v1829
    %v1831 = vpop.f32.mrb[0].mxu0
    %v1832 = vpop.f32.mrb[0].mxu0
    %1833 = vdwg.mxu0
    %v1834 = vmax.f32 %v1828, 0.0
    %v1835 = vmax.f32 %v1830, 0.0
    %v1836 = vpack.c.bf16 %v1834, %v1834
    %v1837 = vpack.c.bf16 %v1835, %v1835
    %s1838 = smul.u32 4, 33
    %s1839 = smul.u32 %s1838, 1
    %s1840 = sshll.u32 %s1839, 4
    %1841 = dma.done %s143, %s1840
    %v1842 = vld [vmem:[#allocation6] sm:$0xf]
    %v1843 = vld [vmem:[#allocation6 + $0x4] sm:$0xf]
    %v1844 = vld [vmem:[#allocation6 + $0x8] sm:$0xf]
    %v1845 = vld [vmem:[#allocation6 + $0xc] sm:$0xf]
    %v1846 = vld [vmem:[#allocation6 + $0x10] sm:$0xf]
    %v1847 = vld [vmem:[#allocation6 + $0x14] sm:$0xf]
    %v1848 = vld [vmem:[#allocation6 + $0x18] sm:$0xf]
    %v1849 = vld [vmem:[#allocation6 + $0x1c] sm:$0xf]
    %v1850 = vld [vmem:[#allocation6 + $0x20] sm:$0xf]
    %v1851 = vld [vmem:[#allocation6 + $0x24] sm:$0xf]
    %v1852 = vld [vmem:[#allocation6 + $0x28] sm:$0xf]
    %v1853 = vld [vmem:[#allocation6 + $0x2c] sm:$0xf]
    %v1854 = vld [vmem:[#allocation6 + $0x30] sm:$0xf]
    %v1855 = vld [vmem:[#allocation6 + $0x34] sm:$0xf]
    %v1856 = vld [vmem:[#allocation6 + $0x38] sm:$0xf]
    %v1857 = vld [vmem:[#allocation6 + $0x3c] sm:$0xf]
    %v1858 = vld [vmem:[#allocation6 + $0x40] sm:$0xf]
    %v1859 = vld [vmem:[#allocation6 + $0x44] sm:$0xf]
    %v1860 = vld [vmem:[#allocation6 + $0x48] sm:$0xf]
    %v1861 = vld [vmem:[#allocation6 + $0x4c] sm:$0xf]
    %v1862 = vld [vmem:[#allocation6 + $0x50] sm:$0xf]
    %v1863 = vld [vmem:[#allocation6 + $0x54] sm:$0xf]
    %v1864 = vld [vmem:[#allocation6 + $0x58] sm:$0xf]
    %v1865 = vld [vmem:[#allocation6 + $0x5c] sm:$0xf]
    %v1866 = vld [vmem:[#allocation6 + $0x60] sm:$0xf]
    %v1867 = vld [vmem:[#allocation6 + $0x64] sm:$0xf]
    %v1868 = vld [vmem:[#allocation6 + $0x68] sm:$0xf]
    %v1869 = vld [vmem:[#allocation6 + $0x6c] sm:$0xf]
    %v1870 = vld [vmem:[#allocation6 + $0x70] sm:$0xf]
    %v1871 = vld [vmem:[#allocation6 + $0x74] sm:$0xf]
    %v1872 = vld [vmem:[#allocation6 + $0x78] sm:$0xf]
    %v1873 = vld [vmem:[#allocation6 + $0x7c] sm:$0xf]
    %v1874 = vld [vmem:[#allocation2 + $0x5] ss:$0 sm:$0xff]
    %v1907 = vunpack.c.l.b16 %v1842
    %v1908 = vunpack.c.l.b16 %v1843
    %v1909 = vunpack.c.l.b16 %v1844
    %v1910 = vunpack.c.l.b16 %v1845
    %v1911 = vunpack.c.l.b16 %v1846
    %v1912 = vunpack.c.l.b16 %v1847
    %v1913 = vunpack.c.l.b16 %v1848
    %v1914 = vunpack.c.l.b16 %v1849
    %v1915 = vunpack.c.l.b16 %v1850
    %v1916 = vunpack.c.l.b16 %v1851
    %v1917 = vunpack.c.l.b16 %v1852
    %v1918 = vunpack.c.l.b16 %v1853
    %v1919 = vunpack.c.l.b16 %v1854
    %v1920 = vunpack.c.l.b16 %v1855
    %v1921 = vunpack.c.l.b16 %v1856
    %v1922 = vunpack.c.l.b16 %v1857
    %v1923 = vunpack.c.l.b16 %v1858
    %v1924 = vunpack.c.l.b16 %v1859
    %v1925 = vunpack.c.l.b16 %v1860
    %v1926 = vunpack.c.l.b16 %v1861
    %v1927 = vunpack.c.l.b16 %v1862
    %v1928 = vunpack.c.l.b16 %v1863
    %v1929 = vunpack.c.l.b16 %v1864
    %v1930 = vunpack.c.l.b16 %v1865
    %v1931 = vunpack.c.l.b16 %v1866
    %v1932 = vunpack.c.l.b16 %v1867
    %v1933 = vunpack.c.l.b16 %v1868
    %v1934 = vunpack.c.l.b16 %v1869
    %v1935 = vunpack.c.l.b16 %v1870
    %v1936 = vunpack.c.l.b16 %v1871
    %v1937 = vunpack.c.l.b16 %v1872
    %v1938 = vunpack.c.l.b16 %v1873
    %v1939 = vpack.c.b16 %v1908, %v1907
    %v1940 = vpack.c.b16 %v1910, %v1909
    %v1941 = vpack.c.b16 %v1912, %v1911
    %v1942 = vpack.c.b16 %v1914, %v1913
    %v1943 = vpack.c.b16 %v1916, %v1915
    %v1944 = vpack.c.b16 %v1918, %v1917
    %v1945 = vpack.c.b16 %v1920, %v1919
    %v1946 = vpack.c.b16 %v1922, %v1921
    %v1947 = vpack.c.b16 %v1924, %v1923
    %v1948 = vpack.c.b16 %v1926, %v1925
    %v1949 = vpack.c.b16 %v1928, %v1927
    %v1950 = vpack.c.b16 %v1930, %v1929
    %v1951 = vpack.c.b16 %v1932, %v1931
    %v1952 = vpack.c.b16 %v1934, %v1933
    %v1953 = vpack.c.b16 %v1936, %v1935
    %v1954 = vpack.c.b16 %v1938, %v1937
    %1971 = vmatprep.subr.bf16.mxu0 0
    %1972 = vmatpush1.bf16.msra.mxu0 %v1939
    %1973 = vmatprep.subr.bf16.mxu0 0
    %1974 = vmatpush1.bf16.msra.mxu0 %v1940
    %1975 = vmatprep.subr.bf16.mxu0 0
    %1976 = vmatpush1.bf16.msra.mxu0 %v1941
    %1977 = vmatprep.subr.bf16.mxu0 0
    %1978 = vmatpush1.bf16.msra.mxu0 %v1942
    %1979 = vmatprep.subr.bf16.mxu0 0
    %1980 = vmatpush1.bf16.msra.mxu0 %v1943
    %1981 = vmatprep.subr.bf16.mxu0 0
    %1982 = vmatpush1.bf16.msra.mxu0 %v1944
    %1983 = vmatprep.subr.bf16.mxu0 0
    %1984 = vmatpush1.bf16.msra.mxu0 %v1945
    %1985 = vmatprep.subr.bf16.mxu0 0
    %1986 = vmatpush1.bf16.msra.mxu0 %v1946
    %1987 = vmatprep.subr.bf16.mxu0 0
    %1988 = vmatpush1.bf16.msra.mxu0 %v1947
    %1989 = vmatprep.subr.bf16.mxu0 0
    %1990 = vmatpush1.bf16.msra.mxu0 %v1948
    %1991 = vmatprep.subr.bf16.mxu0 0
    %1992 = vmatpush1.bf16.msra.mxu0 %v1949
    %1993 = vmatprep.subr.bf16.mxu0 0
    %1994 = vmatpush1.bf16.msra.mxu0 %v1950
    %1995 = vmatprep.subr.bf16.mxu0 0
    %1996 = vmatpush1.bf16.msra.mxu0 %v1951
    %1997 = vmatprep.subr.bf16.mxu0 0
    %1998 = vmatpush1.bf16.msra.mxu0 %v1952
    %1999 = vmatprep.subr.bf16.mxu0 0
    %2000 = vmatpush1.bf16.msra.mxu0 %v1953
    %2001 = vmatprep.subr.bf16.mxu0 0
    %2002 = vmatpush1.bf16.msra.mxu0 %v1954
    %2003 = vmatprep.mubr.bf16.mxu0 %v1837
    %2004 = vmatmul.mubr.bf16.gmra.mrb[0].mxu0 %v1836
    %v2005 = vpop.f32.mrb[0].mxu0
    %v2006 = vadd.f32 %v1874, %v2005
    %v2007 = vpop.f32.mrb[0].mxu0
    %v2008 = vpop.f32.mrb[0].mxu0
    %v2009 = vpop.f32.mrb[0].mxu0
    %2010 = vdwg.mxu0
    %v2011 = vmax.f32 %v2006, 0.0
    %v2012 = vld [vmem:[#allocation6 + $0x80] sm:$0x1]
    %v2013 = vunpack.c.l.bf16 %v2012
    %v2014 = vlaneseq
    %v2015 = vshrl.u32 %v2014, 7
    %v2016 = vsub.s32 0, %v2015
    %v2017 = vrot.slane %v2013, %v2016
    %v2018 = vmul.f32 %v2011, %v2017
    %2019 = vadd.xlane.f32.xlu0 %v2018
    %v2020 = vpop.xlane.xlu0 %2019
    %v2021 = vld [vmem:[#allocation2 + $0x6] ss:$0 sm:$0xff]
    %v2022 = vadd.f32 %v2020, %v2021
    %v2023 = vxor.u32 %v2022, 2147483648
    %v2024 = vmul.f32 %v2023, 1.442695
    %v2025 = vpow.pop %v2024
    %v2026 = vadd.f32 %v2025, 1.0
    %v2027 = vrcp.pop %v2026
    %v2028 = vmul.f32 1.0, %v2027
    %vm2029 = vcmask 7168
    %2030 = vst.msk [vmem:[%s6] sm:$0xff] %vm2029, %v2028
    // Predicated region
    $region18: #{net_forward.1} parent=1 // pred_check
      _
    $region19: #{net_forward.1} parent=1 // pred_check_branch
      %2032 = sbr.rel (0) target = $region21
    $region20: #{net_forward.1} parent=1 // pred_region
      _
    $region21: #{net_forward.1} parent=1 // pred_fallthru
      _
    // Predicated region
    $region22: #{net_forward.1} parent=1 // pred_check
      _
    $region23: #{net_forward.1} parent=1 // pred_check_branch
      %2034 = sbr.rel (0) target = $region25
    $region24: #{net_forward.1} parent=1 // pred_region
      _
    $region25: #{net_forward.1} parent=1 // pred_fallthru
      _
    %2035 = vsyncpa [#allocation9], 1
  %2036 = vsyncmov [#allocation7]
  %s2037 = vpop.sfrf %2036
  %p2038 = scmp.eq.s32.totalorder %s2037, 0
  %p2039 = pneg %p2038
  %2041 = shalt.err (%p2039)
  %s2042 = scalar_lea.sflag [#allocation7], 1
  %2043 = vsyncmov %s2042
  %s2044 = vpop.sfrf %2043
  %p2045 = scmp.eq.s32.totalorder %s2044, 0
  %p2046 = pneg %p2045
  %2048 = shalt.err (%p2046)
  %s2049 = scalar_lea.sflag [#allocation7], 2
  %2050 = vsyncmov %s2049
  %s2051 = vpop.sfrf %2050
  %p2052 = scmp.eq.s32.totalorder %s2051, 0
  %p2053 = pneg %p2052
  %2055 = shalt.err (%p2053)
  %s2056 = scalar_lea.sflag [#allocation7], 3
  %2057 = vsyncmov %s2056
  %s2058 = vpop.sfrf %2057
  %p2059 = scmp.eq.s32.totalorder %s2058, 0
  %p2060 = pneg %p2059
  %2062 = shalt.err (%p2060)
  %s2063 = scalar_lea.sflag [#allocation7], 4
  %2064 = vsyncmov %s2063
  %s2065 = vpop.sfrf %2064
  %p2066 = scmp.eq.s32.totalorder %s2065, 0
  %p2067 = pneg %p2066
  %2069 = shalt.err (%p2067)

</llo_original>
